<compile_context>
chip_gen: v7x
topology: tpu7x:2x2x1
jax: 0.10.0
libtpu: 0.0.40
codegen_flags: <defaults>
</compile_context>

<pallas_src>
import math
import jax
import jax.numpy as jnp
from jax.experimental import pallas as pl
from jax.experimental.pallas import tpu as pltpu

B, T, H = 2, 8, 32          # batch, time_series_size, hidden_size
L, NH = 2, 4                # encoder layers, attention heads
DH = H // NH                # head dim
FF = 4 * H                  # FFN inner width
R = B * T                   # stacked rows (time-major: row r = t*B + b)
LN_EPS = 1e-5

# vecs_f32 buffer layout (rows, width H):
#   rows [0, R)            : pos + emb_b, time-major stacked
#   row  R                 : emb_w
#   rows R+1 + 4*l + {0..3}: ln_g0, ln_b0, ln_g1, ln_b1 for layer l
V_EMB = R
V_LN0 = R + 1
N_VEC_ROWS = R + 1 + 4 * L


def _layernorm(x, g, b):
    mu = jnp.mean(x, axis=-1, keepdims=True)
    var = jnp.mean((x - mu) ** 2, axis=-1, keepdims=True)
    return (x - mu) * jax.lax.rsqrt(var + LN_EPS) * g + b


def _gelu(x):
    # tanh-approximate GELU (see TODO above)
    return 0.5 * x * (1.0 + jnp.tanh(0.7978845608028654 * (x + 0.044715 * x * x * x)))


# ----------------------------------------------------------------------------
# Pallas kernel: full forward (embedding -> L encoder layers -> output head)
# for ALL batch elements in a single invocation (grid = ()).
# ----------------------------------------------------------------------------
def tsb_kernel(x_ref, vecs_ref, attn_ref, ffn1_ref, ffn2_ref, outw_ref, y_ref):
    f32 = jnp.float32
    bf = lambda a: a.astype(jnp.bfloat16)

    posb = vecs_ref[0:R, :]                       # (R, H)  pos + emb bias
    emb_w = vecs_ref[V_EMB:V_EMB + 1, :]          # (1, H)
    # input embedding as broadcast multiply (no K=1 matmul)
    h = x_ref[...] * emb_w + posb                 # (R, H) f32

    # block-diagonal attention bias: time-major rows r = t*B + b belong to
    # batch r % B; B is a power of two -> xor/and trick (no integer modulo).
    ri = jax.lax.broadcasted_iota(jnp.int32, (R, R), 0)
    ci = jax.lax.broadcasted_iota(jnp.int32, (R, R), 1)
    attn_bias = jnp.where(((ri ^ ci) & (B - 1)) == 0, 0.0, -1e9).astype(f32)

    for l in range(L):                            # L = 2, statically unrolled
        # ---- attention -------------------------------------------------
        wqkv = attn_ref[l, 0:H, 0:3 * H]                       # (H, 3H) bf16
        wo = attn_ref[l, 0:H, 3 * H:4 * H]                     # (H, H)  bf16
        bqkv = attn_ref[l, H:H + 1, 0:3 * H].astype(f32)       # (1, 3H)
        bo = attn_ref[l, H:H + 1, 3 * H:4 * H].astype(f32)     # (1, H)

        # fused Q/K/V projection (softmax scale pre-folded into Q weights)
        qkv = jnp.dot(bf(h), wqkv, preferred_element_type=f32) + bqkv   # (R, 3H)

        ctxs = []
        for hh in range(NH):                      # static DH-lane slices
            q = bf(qkv[:, hh * DH:(hh + 1) * DH])
            k = bf(qkv[:, H + hh * DH:H + (hh + 1) * DH])
            v = bf(qkv[:, 2 * H + hh * DH:2 * H + (hh + 1) * DH])
            s = jax.lax.dot_general(q, k, (((1,), (1,)), ((), ())),
                                    preferred_element_type=f32) + attn_bias
            s = s - jnp.max(s, axis=-1, keepdims=True)
            p = jnp.exp(s)                                    # f32
            denom = jnp.sum(p, axis=-1, keepdims=True)
            ctx = jnp.dot(bf(p), v, preferred_element_type=f32)          # (R, DH)
            # EUP approximate reciprocal instead of a VPU divide
            ctxs.append(ctx * pl.reciprocal(denom, approx=True))
        ctx_all = jnp.concatenate(ctxs, axis=-1)                          # (R, H)
        attn_out = jnp.dot(bf(ctx_all), wo, preferred_element_type=f32) + bo

        # ---- post-LN residual blocks (BERT style) -----------------------
        base = V_LN0 + 4 * l
        g0 = vecs_ref[base:base + 1, :]
        b0 = vecs_ref[base + 1:base + 2, :]
        g1 = vecs_ref[base + 2:base + 3, :]
        b1 = vecs_ref[base + 3:base + 4, :]

        h1 = _layernorm(h + attn_out, g0, b0)

        w1 = ffn1_ref[l, 0:H, :]                                # (H, FF) bf16
        fb1 = ffn1_ref[l, H:H + 1, :].astype(f32)               # (1, FF)
        w2 = ffn2_ref[l, 0:FF, :]                               # (FF, H) bf16
        fb2 = ffn2_ref[l, FF:FF + 1, :].astype(f32)             # (1, H)

        f = jnp.dot(bf(h1), w1, preferred_element_type=f32) + fb1
        f = _gelu(f)
        f = jnp.dot(bf(f), w2, preferred_element_type=f32) + fb2
        h = _layernorm(h1 + f, g1, b1)

    # ---- output head: Linear(T*H -> T) as ONE matmul with K = T*H ---------
    # time step t occupies rows [t*B, (t+1)*B) of the time-major stack; lane-
    # concatenating the T contiguous (B, H) blocks gives the row-major flatten
    # h2[b, t*H + d] = h[t*B + b, d], matching PyTorch's reshape(B, T*H).
    h2 = jnp.concatenate([h[t * B:(t + 1) * B, :] for t in range(T)], axis=1)
    y = jnp.dot(bf(h2), outw_ref[0:T * H, :], preferred_element_type=f32)
    y_ref[...] = y + outw_ref[T * H:T * H + 1, :].astype(f32)    # single (B, T) store


# ----------------------------------------------------------------------------
# One-time parameter repacking (hoisted out of the per-call path).
# ----------------------------------------------------------------------------
def pack_params(params):
    (emb_w, emb_b, pos, attn_w, attn_b, ln_g, ln_b,
     ffn_w1, ffn_b1, ffn_w2, ffn_b2, out_wt, out_b) = params

    scale = 1.0 / math.sqrt(DH)
    # fold the softmax scale into Q weights/bias (mathematically identical)
    wq = attn_w[:, 0] * scale
    bq = attn_b[:, 0] * scale
    attn_w_rows = jnp.concatenate([wq, attn_w[:, 1], attn_w[:, 2], attn_w[:, 3]],
                                  axis=-1)                       # (L, H, 4H)
    attn_b_row = jnp.concatenate([bq, attn_b[:, 1], attn_b[:, 2], attn_b[:, 3]],
                                 axis=-1)                        # (L, 1, 4H)
    attn_p = jnp.concatenate([attn_w_rows, attn_b_row],
                             axis=1).astype(jnp.bfloat16)        # (L, H+1, 4H)

    # f32 per-row vector params: pos(+emb bias) time-major, emb weight, LN params
    posb = jnp.repeat(pos + emb_b, B, axis=0)                    # (R, H), row t*B+b
    ln_rows = []
    for l in range(L):
        ln_rows += [ln_g[l, 0], ln_b[l, 0], ln_g[l, 1], ln_b[l, 1]]
    vecs = jnp.concatenate([posb, emb_w] + ln_rows, axis=0).astype(jnp.float32)
    assert vecs.shape == (N_VEC_ROWS, H)

    ffn1_p = jnp.concatenate([ffn_w1, ffn_b1], axis=1).astype(jnp.bfloat16)  # (L, H+1, FF)
    ffn2_p = jnp.concatenate([ffn_w2, ffn_b2], axis=1).astype(jnp.bfloat16)  # (L, FF+1, H)
    outw_p = jnp.concatenate([out_wt, out_b], axis=0).astype(jnp.bfloat16)   # (T*H+1, T)

    return (vecs, attn_p, ffn1_p, ffn2_p, outw_p)


# ----------------------------------------------------------------------------
# Per-call wrapper: only stacks x time-major and calls the kernel.
# ----------------------------------------------------------------------------
@jax.jit
def tsb_forward(x, packed):
    x_stack = x.astype(jnp.float32).T.reshape(R, 1)      # time-major rows r = t*B + b
    y = pl.pallas_call(
        tsb_kernel,
        out_shape=jax.ShapeDtypeStruct((B, T), jnp.float32),
        in_specs=[pl.BlockSpec(memory_space=pltpu.MemorySpace.VMEM)] * (1 + len(packed)),
        out_specs=pl.BlockSpec(memory_space=pltpu.MemorySpace.VMEM),
    )(x_stack, *packed)
    # matches PyTorch: .reshape(batch_size, time_series_size, -1)
    return y.reshape(B, T, 1)


# ----------------------------------------------------------------------------
# Pure-JAX f32 reference (independent formulation, original weight layout).
# ----------------------------------------------------------------------------
def _reference_single(x_col, emb_w, emb_b, pos, attn_w, attn_b, ln_g, ln_b,
                      ffn_w1, ffn_b1, ffn_w2, ffn_b2, out_wt, out_b):
    h = x_col * emb_w + emb_b + pos                                   # (T, H)
    scale = 1.0 / math.sqrt(DH)
    for l in range(L):
        wq, wk, wv, wo = attn_w[l, 0], attn_w[l, 1], attn_w[l, 2], attn_w[l, 3]
        bq, bk, bv, bo = attn_b[l, 0], attn_b[l, 1], attn_b[l, 2], attn_b[l, 3]
        q = h @ wq + bq
        k = h @ wk + bk
        v = h @ wv + bv
        ctxs = []
        for hh in range(NH):
            sl = slice(hh * DH, (hh + 1) * DH)
            s = (q[:, sl] @ k[:, sl].T) * scale
            p = jax.nn.softmax(s, axis=-1)
            ctxs.append(p @ v[:, sl])
        attn_out = jnp.concatenate(ctxs, axis=-1) @ wo + bo
        h1 = _layernorm(h + attn_out, ln_g[l, 0], ln_b[l, 0])
        f = _gelu(h1 @ ffn_w1[l] + ffn_b1[l])
        f = f @ ffn_w2[l] + ffn_b2[l]
        h = _layernorm(h1 + f, ln_g[l, 1], ln_b[l, 1])
    flat = h.reshape(1, T * H)                                        # row-major flatten
    return flat @ out_wt + out_b                                      # (1, T)


def reference_forward(x, params):
    outs = []
    for b in range(B):
        x_col = x[b].astype(jnp.float32)[:, None]
        outs.append(_reference_single(x_col, *params))
    return jnp.concatenate(outs, axis=0).reshape(B, T, 1)


def init_params(key):
    ks = jax.random.split(key, 11)
    s = 0.02
    emb_w = s * jax.random.normal(ks[0], (1, H), jnp.float32)       # Linear(1,H).weight.T
    emb_b = s * jax.random.normal(ks[1], (1, H), jnp.float32)
    pos = s * jax.random.normal(ks[2], (T, H), jnp.float32)
    attn_w = s * jax.random.normal(ks[3], (L, 4, H, H), jnp.float32)   # q/k/v/o W^T (in,out)
    attn_b = s * jax.random.normal(ks[4], (L, 4, 1, H), jnp.float32)
    ln_g = jnp.ones((L, 2, 1, H), jnp.float32)
    ln_b = jnp.zeros((L, 2, 1, H), jnp.float32)
    ffn_w1 = s * jax.random.normal(ks[5], (L, H, FF), jnp.float32)
    ffn_b1 = s * jax.random.normal(ks[6], (L, 1, FF), jnp.float32)
    ffn_w2 = s * jax.random.normal(ks[7], (L, FF, H), jnp.float32)
    ffn_b2 = s * jax.random.normal(ks[8], (L, 1, H), jnp.float32)
    out_wt = s * jax.random.normal(ks[9], (T * H, T), jnp.float32)  # output_layer.weight.T
    out_b = s * jax.random.normal(ks[10], (1, T), jnp.float32)
    return (emb_w, emb_b, pos, attn_w, attn_b, ln_g, ln_b,
            ffn_w1, ffn_b1, ffn_w2, ffn_b2, out_wt, out_b)


if __name__ == "__main__":
    key = jax.random.PRNGKey(0)
    kx, kp = jax.random.split(key)
    x = jax.random.normal(kx, (B, T), jnp.float32)       # (batch, time_series_size)
    params = init_params(kp)
    packed = pack_params(params)                          # hoisted: once, not per call

    y = tsb_forward(x, packed)
    y = jax.block_until_ready(y)
    assert y.shape == (B, T, 1)

    y_ref = reference_forward(x, params)
    max_err = float(jnp.max(jnp.abs(y - y_ref)))
    # bf16 MXU operands (f32 accumulation) -> widened tolerance vs pure-f32 reference.
    assert max_err < 2e-2, f"mismatch vs reference: {max_err}"

    print("KERNEL_OK")
</pallas_src>

<mosaic_0001>
module attributes {stable_mosaic.version = 11 : i64} {
  func.func @tsb_kernel(%arg0: memref<16x1xf32, #tpu.memory_space<vmem>>, %arg1: memref<25x32xf32, #tpu.memory_space<vmem>>, %arg2: memref<2x33x128xbf16, #tpu.memory_space<vmem>>, %arg3: memref<2x33x128xbf16, #tpu.memory_space<vmem>>, %arg4: memref<2x129x32xbf16, #tpu.memory_space<vmem>>, %arg5: memref<257x8xbf16, #tpu.memory_space<vmem>>, %arg6: memref<2x8xf32, #tpu.memory_space<vmem>>) attributes {dimension_semantics = [], scalar_prefetch = 0 : i64, scratch_operands = 0 : i64, tpu.core_type = #tpu.core_type<tc>} {
    %c0 = arith.constant 0 : index
    %c0_0 = arith.constant 0 : index
    %0 = vector.load %arg1[%c0, %c0_0] : memref<25x32xf32, #tpu.memory_space<vmem>>, vector<16x32xf32>
    %c16 = arith.constant 16 : index
    %c0_1 = arith.constant 0 : index
    %1 = vector.load %arg1[%c16, %c0_1] : memref<25x32xf32, #tpu.memory_space<vmem>>, vector<1x32xf32>
    %c0_2 = arith.constant 0 : index
    %c0_3 = arith.constant 0 : index
    %2 = vector.load %arg0[%c0_2, %c0_3] : memref<16x1xf32, #tpu.memory_space<vmem>>, vector<16x1xf32>
    %3 = vector.broadcast %2 : vector<16x1xf32> to vector<16x32xf32>
    %4 = vector.broadcast %1 : vector<1x32xf32> to vector<16x32xf32>
    %5 = arith.mulf %3, %4 : vector<16x32xf32>
    %6 = arith.addf %5, %0 : vector<16x32xf32>
    %7 = tpu.iota {dimensions = array<i32: 0>} : vector<16x16xi32>
    %8 = tpu.iota {dimensions = array<i32: 1>} : vector<16x16xi32>
    %9 = arith.xori %7, %8 : vector<16x16xi32>
    %c1_i32 = arith.constant 1 : i32
    %10 = vector.broadcast %c1_i32 : i32 to vector<16x16xi32>
    %11 = arith.andi %9, %10 : vector<16x16xi32>
    %c0_i32 = arith.constant 0 : i32
    %12 = vector.broadcast %c0_i32 : i32 to vector<16x16xi32>
    %13 = arith.cmpi eq, %11, %12 : vector<16x16xi32>
    %cst = arith.constant 0.000000e+00 : f32
    %cst_4 = arith.constant -1.000000e+09 : f32
    %14 = vector.broadcast %cst : f32 to vector<16x16xf32>
    %15 = vector.broadcast %cst_4 : f32 to vector<16x16xf32>
    %16 = arith.select %13, %14, %15 : vector<16x16xi1>, vector<16x16xf32>
    %c0_5 = arith.constant 0 : index
    %c0_6 = arith.constant 0 : index
    %c0_7 = arith.constant 0 : index
    %17 = vector.load %arg2[%c0_5, %c0_6, %c0_7] : memref<2x33x128xbf16, #tpu.memory_space<vmem>>, vector<1x32x96xbf16>
    %18 = vector.shape_cast %17 : vector<1x32x96xbf16> to vector<32x96xbf16>
    %c0_8 = arith.constant 0 : index
    %c0_9 = arith.constant 0 : index
    %c96 = arith.constant 96 : index
    %19 = vector.load %arg2[%c0_8, %c0_9, %c96] : memref<2x33x128xbf16, #tpu.memory_space<vmem>>, vector<1x32x32xbf16>
    %20 = vector.shape_cast %19 : vector<1x32x32xbf16> to vector<32x32xbf16>
    %c0_10 = arith.constant 0 : index
    %c32 = arith.constant 32 : index
    %c0_11 = arith.constant 0 : index
    %21 = vector.load %arg2[%c0_10, %c32, %c0_11] : memref<2x33x128xbf16, #tpu.memory_space<vmem>>, vector<1x1x96xbf16>
    %22 = vector.shape_cast %21 : vector<1x1x96xbf16> to vector<1x96xbf16>
    %23 = arith.extf %22 : vector<1x96xbf16> to vector<1x96xf32>
    %c0_12 = arith.constant 0 : index
    %c32_13 = arith.constant 32 : index
    %c96_14 = arith.constant 96 : index
    %24 = vector.load %arg2[%c0_12, %c32_13, %c96_14] : memref<2x33x128xbf16, #tpu.memory_space<vmem>>, vector<1x1x32xbf16>
    %25 = vector.shape_cast %24 : vector<1x1x32xbf16> to vector<1x32xbf16>
    %26 = arith.extf %25 : vector<1x32xbf16> to vector<1x32xf32>
    %27 = arith.truncf %6 : vector<16x32xf32> to vector<16x32xbf16>
    %cst_15 = arith.constant dense<0.000000e+00> : vector<16x96xf32>
    %28 = tpu.matmul %27, %18, %cst_15 {dimension_numbers = #tpu.dot_dimension_numbers<[1], [0], [0], [1], [0, 0, 1, 1], [], []>} : vector<16x32xbf16>, vector<32x96xbf16>, vector<16x96xf32> -> vector<16x96xf32>
    %29 = vector.broadcast %23 : vector<1x96xf32> to vector<16x96xf32>
    %30 = arith.addf %28, %29 : vector<16x96xf32>
    %31 = vector.extract_strided_slice %30 {offsets = [0, 0], sizes = [16, 8], strides = [1, 1]} : vector<16x96xf32> to vector<16x8xf32>
    %32 = arith.truncf %31 : vector<16x8xf32> to vector<16x8xbf16>
    %33 = vector.extract_strided_slice %30 {offsets = [0, 32], sizes = [16, 8], strides = [1, 1]} : vector<16x96xf32> to vector<16x8xf32>
    %34 = arith.truncf %33 : vector<16x8xf32> to vector<16x8xbf16>
    %35 = vector.extract_strided_slice %30 {offsets = [0, 64], sizes = [16, 8], strides = [1, 1]} : vector<16x96xf32> to vector<16x8xf32>
    %36 = arith.truncf %35 : vector<16x8xf32> to vector<16x8xbf16>
    %cst_16 = arith.constant dense<0.000000e+00> : vector<16x16xf32>
    %37 = tpu.matmul %32, %34, %cst_16 {dimension_numbers = #tpu.dot_dimension_numbers<[1], [1], [0], [0], [0, 0, 1, 0], [], []>} : vector<16x8xbf16>, vector<16x8xbf16>, vector<16x16xf32> -> vector<16x16xf32>
    %38 = arith.addf %37, %16 : vector<16x16xf32>
    %cst_17 = arith.constant dense<0xFF800000> : vector<16xf32>
    %39 = vector.multi_reduction <maximumf>, %38, %cst_17 [1] : vector<16x16xf32> to vector<16xf32>
    %40 = vector.shape_cast %39 : vector<16xf32> to vector<16x1xf32>
    %41 = vector.broadcast %40 : vector<16x1xf32> to vector<16x16xf32>
    %42 = arith.subf %38, %41 : vector<16x16xf32>
    %43 = math.exp %42 : vector<16x16xf32>
    %cst_18 = arith.constant dense<0.000000e+00> : vector<16xf32>
    %44 = vector.multi_reduction <add>, %43, %cst_18 [1] : vector<16x16xf32> to vector<16xf32>
    %45 = vector.shape_cast %44 : vector<16xf32> to vector<16x1xf32>
    %46 = arith.truncf %43 : vector<16x16xf32> to vector<16x16xbf16>
    %cst_19 = arith.constant dense<0.000000e+00> : vector<16x8xf32>
    %47 = tpu.matmul %46, %36, %cst_19 {dimension_numbers = #tpu.dot_dimension_numbers<[1], [0], [0], [1], [0, 0, 1, 1], [], []>} : vector<16x16xbf16>, vector<16x8xbf16>, vector<16x8xf32> -> vector<16x8xf32>
    %48 = tpu.reciprocal %45 {approx = true} : vector<16x1xf32> -> vector<16x1xf32>
    %49 = vector.broadcast %48 : vector<16x1xf32> to vector<16x8xf32>
    %50 = arith.mulf %47, %49 : vector<16x8xf32>
    %51 = vector.extract_strided_slice %30 {offsets = [0, 8], sizes = [16, 8], strides = [1, 1]} : vector<16x96xf32> to vector<16x8xf32>
    %52 = arith.truncf %51 : vector<16x8xf32> to vector<16x8xbf16>
    %53 = vector.extract_strided_slice %30 {offsets = [0, 40], sizes = [16, 8], strides = [1, 1]} : vector<16x96xf32> to vector<16x8xf32>
    %54 = arith.truncf %53 : vector<16x8xf32> to vector<16x8xbf16>
    %55 = vector.extract_strided_slice %30 {offsets = [0, 72], sizes = [16, 8], strides = [1, 1]} : vector<16x96xf32> to vector<16x8xf32>
    %56 = arith.truncf %55 : vector<16x8xf32> to vector<16x8xbf16>
    %cst_20 = arith.constant dense<0.000000e+00> : vector<16x16xf32>
    %57 = tpu.matmul %52, %54, %cst_20 {dimension_numbers = #tpu.dot_dimension_numbers<[1], [1], [0], [0], [0, 0, 1, 0], [], []>} : vector<16x8xbf16>, vector<16x8xbf16>, vector<16x16xf32> -> vector<16x16xf32>
    %58 = arith.addf %57, %16 : vector<16x16xf32>
    %cst_21 = arith.constant dense<0xFF800000> : vector<16xf32>
    %59 = vector.multi_reduction <maximumf>, %58, %cst_21 [1] : vector<16x16xf32> to vector<16xf32>
    %60 = vector.shape_cast %59 : vector<16xf32> to vector<16x1xf32>
    %61 = vector.broadcast %60 : vector<16x1xf32> to vector<16x16xf32>
    %62 = arith.subf %58, %61 : vector<16x16xf32>
    %63 = math.exp %62 : vector<16x16xf32>
    %cst_22 = arith.constant dense<0.000000e+00> : vector<16xf32>
    %64 = vector.multi_reduction <add>, %63, %cst_22 [1] : vector<16x16xf32> to vector<16xf32>
    %65 = vector.shape_cast %64 : vector<16xf32> to vector<16x1xf32>
    %66 = arith.truncf %63 : vector<16x16xf32> to vector<16x16xbf16>
    %cst_23 = arith.constant dense<0.000000e+00> : vector<16x8xf32>
    %67 = tpu.matmul %66, %56, %cst_23 {dimension_numbers = #tpu.dot_dimension_numbers<[1], [0], [0], [1], [0, 0, 1, 1], [], []>} : vector<16x16xbf16>, vector<16x8xbf16>, vector<16x8xf32> -> vector<16x8xf32>
    %68 = tpu.reciprocal %65 {approx = true} : vector<16x1xf32> -> vector<16x1xf32>
    %69 = vector.broadcast %68 : vector<16x1xf32> to vector<16x8xf32>
    %70 = arith.mulf %67, %69 : vector<16x8xf32>
    %71 = vector.extract_strided_slice %30 {offsets = [0, 16], sizes = [16, 8], strides = [1, 1]} : vector<16x96xf32> to vector<16x8xf32>
    %72 = arith.truncf %71 : vector<16x8xf32> to vector<16x8xbf16>
    %73 = vector.extract_strided_slice %30 {offsets = [0, 48], sizes = [16, 8], strides = [1, 1]} : vector<16x96xf32> to vector<16x8xf32>
    %74 = arith.truncf %73 : vector<16x8xf32> to vector<16x8xbf16>
    %75 = vector.extract_strided_slice %30 {offsets = [0, 80], sizes = [16, 8], strides = [1, 1]} : vector<16x96xf32> to vector<16x8xf32>
    %76 = arith.truncf %75 : vector<16x8xf32> to vector<16x8xbf16>
    %cst_24 = arith.constant dense<0.000000e+00> : vector<16x16xf32>
    %77 = tpu.matmul %72, %74, %cst_24 {dimension_numbers = #tpu.dot_dimension_numbers<[1], [1], [0], [0], [0, 0, 1, 0], [], []>} : vector<16x8xbf16>, vector<16x8xbf16>, vector<16x16xf32> -> vector<16x16xf32>
    %78 = arith.addf %77, %16 : vector<16x16xf32>
    %cst_25 = arith.constant dense<0xFF800000> : vector<16xf32>
    %79 = vector.multi_reduction <maximumf>, %78, %cst_25 [1] : vector<16x16xf32> to vector<16xf32>
    %80 = vector.shape_cast %79 : vector<16xf32> to vector<16x1xf32>
    %81 = vector.broadcast %80 : vector<16x1xf32> to vector<16x16xf32>
    %82 = arith.subf %78, %81 : vector<16x16xf32>
    %83 = math.exp %82 : vector<16x16xf32>
    %cst_26 = arith.constant dense<0.000000e+00> : vector<16xf32>
    %84 = vector.multi_reduction <add>, %83, %cst_26 [1] : vector<16x16xf32> to vector<16xf32>
    %85 = vector.shape_cast %84 : vector<16xf32> to vector<16x1xf32>
    %86 = arith.truncf %83 : vector<16x16xf32> to vector<16x16xbf16>
    %cst_27 = arith.constant dense<0.000000e+00> : vector<16x8xf32>
    %87 = tpu.matmul %86, %76, %cst_27 {dimension_numbers = #tpu.dot_dimension_numbers<[1], [0], [0], [1], [0, 0, 1, 1], [], []>} : vector<16x16xbf16>, vector<16x8xbf16>, vector<16x8xf32> -> vector<16x8xf32>
    %88 = tpu.reciprocal %85 {approx = true} : vector<16x1xf32> -> vector<16x1xf32>
    %89 = vector.broadcast %88 : vector<16x1xf32> to vector<16x8xf32>
    %90 = arith.mulf %87, %89 : vector<16x8xf32>
    %91 = vector.extract_strided_slice %30 {offsets = [0, 24], sizes = [16, 8], strides = [1, 1]} : vector<16x96xf32> to vector<16x8xf32>
    %92 = arith.truncf %91 : vector<16x8xf32> to vector<16x8xbf16>
    %93 = vector.extract_strided_slice %30 {offsets = [0, 56], sizes = [16, 8], strides = [1, 1]} : vector<16x96xf32> to vector<16x8xf32>
    %94 = arith.truncf %93 : vector<16x8xf32> to vector<16x8xbf16>
    %95 = vector.extract_strided_slice %30 {offsets = [0, 88], sizes = [16, 8], strides = [1, 1]} : vector<16x96xf32> to vector<16x8xf32>
    %96 = arith.truncf %95 : vector<16x8xf32> to vector<16x8xbf16>
    %cst_28 = arith.constant dense<0.000000e+00> : vector<16x16xf32>
    %97 = tpu.matmul %92, %94, %cst_28 {dimension_numbers = #tpu.dot_dimension_numbers<[1], [1], [0], [0], [0, 0, 1, 0], [], []>} : vector<16x8xbf16>, vector<16x8xbf16>, vector<16x16xf32> -> vector<16x16xf32>
    %98 = arith.addf %97, %16 : vector<16x16xf32>
    %cst_29 = arith.constant dense<0xFF800000> : vector<16xf32>
    %99 = vector.multi_reduction <maximumf>, %98, %cst_29 [1] : vector<16x16xf32> to vector<16xf32>
    %100 = vector.shape_cast %99 : vector<16xf32> to vector<16x1xf32>
    %101 = vector.broadcast %100 : vector<16x1xf32> to vector<16x16xf32>
    %102 = arith.subf %98, %101 : vector<16x16xf32>
    %103 = math.exp %102 : vector<16x16xf32>
    %cst_30 = arith.constant dense<0.000000e+00> : vector<16xf32>
    %104 = vector.multi_reduction <add>, %103, %cst_30 [1] : vector<16x16xf32> to vector<16xf32>
    %105 = vector.shape_cast %104 : vector<16xf32> to vector<16x1xf32>
    %106 = arith.truncf %103 : vector<16x16xf32> to vector<16x16xbf16>
    %cst_31 = arith.constant dense<0.000000e+00> : vector<16x8xf32>
    %107 = tpu.matmul %106, %96, %cst_31 {dimension_numbers = #tpu.dot_dimension_numbers<[1], [0], [0], [1], [0, 0, 1, 1], [], []>} : vector<16x16xbf16>, vector<16x8xbf16>, vector<16x8xf32> -> vector<16x8xf32>
    %108 = tpu.reciprocal %105 {approx = true} : vector<16x1xf32> -> vector<16x1xf32>
    %109 = vector.broadcast %108 : vector<16x1xf32> to vector<16x8xf32>
    %110 = arith.mulf %107, %109 : vector<16x8xf32>
    %111 = tpu.concatenate %50, %70, %90, %110 in 1 : vector<16x8xf32>, vector<16x8xf32>, vector<16x8xf32>, vector<16x8xf32> -> vector<16x32xf32>
    %112 = arith.truncf %111 : vector<16x32xf32> to vector<16x32xbf16>
    %cst_32 = arith.constant dense<0.000000e+00> : vector<16x32xf32>
    %113 = tpu.matmul %112, %20, %cst_32 {dimension_numbers = #tpu.dot_dimension_numbers<[1], [0], [0], [1], [0, 0, 1, 1], [], []>} : vector<16x32xbf16>, vector<32x32xbf16>, vector<16x32xf32> -> vector<16x32xf32>
    %114 = vector.broadcast %26 : vector<1x32xf32> to vector<16x32xf32>
    %115 = arith.addf %113, %114 : vector<16x32xf32>
    %c17 = arith.constant 17 : index
    %c0_33 = arith.constant 0 : index
    %116 = vector.load %arg1[%c17, %c0_33] : memref<25x32xf32, #tpu.memory_space<vmem>>, vector<1x32xf32>
    %c18 = arith.constant 18 : index
    %c0_34 = arith.constant 0 : index
    %117 = vector.load %arg1[%c18, %c0_34] : memref<25x32xf32, #tpu.memory_space<vmem>>, vector<1x32xf32>
    %c19 = arith.constant 19 : index
    %c0_35 = arith.constant 0 : index
    %118 = vector.load %arg1[%c19, %c0_35] : memref<25x32xf32, #tpu.memory_space<vmem>>, vector<1x32xf32>
    %c20 = arith.constant 20 : index
    %c0_36 = arith.constant 0 : index
    %119 = vector.load %arg1[%c20, %c0_36] : memref<25x32xf32, #tpu.memory_space<vmem>>, vector<1x32xf32>
    %120 = arith.addf %6, %115 : vector<16x32xf32>
    %cst_37 = arith.constant dense<0.000000e+00> : vector<16xf32>
    %121 = vector.multi_reduction <add>, %120, %cst_37 [1] : vector<16x32xf32> to vector<16xf32>
    %122 = vector.shape_cast %121 : vector<16xf32> to vector<16x1xf32>
    %cst_38 = arith.constant 3.200000e+01 : f32
    %123 = vector.broadcast %cst_38 : f32 to vector<16x1xf32>
    %124 = arith.divf %122, %123 : vector<16x1xf32>
    %125 = vector.broadcast %124 : vector<16x1xf32> to vector<16x32xf32>
    %126 = arith.subf %120, %125 : vector<16x32xf32>
    %127 = arith.mulf %126, %126 : vector<16x32xf32>
    %cst_39 = arith.constant dense<0.000000e+00> : vector<16xf32>
    %128 = vector.multi_reduction <add>, %127, %cst_39 [1] : vector<16x32xf32> to vector<16xf32>
    %129 = vector.shape_cast %128 : vector<16xf32> to vector<16x1xf32>
    %cst_40 = arith.constant 3.200000e+01 : f32
    %130 = vector.broadcast %cst_40 : f32 to vector<16x1xf32>
    %131 = arith.divf %129, %130 : vector<16x1xf32>
    %132 = vector.broadcast %124 : vector<16x1xf32> to vector<16x32xf32>
    %133 = arith.subf %120, %132 : vector<16x32xf32>
    %cst_41 = arith.constant 9.99999974E-6 : f32
    %134 = vector.broadcast %cst_41 : f32 to vector<16x1xf32>
    %135 = arith.addf %131, %134 : vector<16x1xf32>
    %136 = math.rsqrt %135 : vector<16x1xf32>
    %137 = vector.broadcast %136 : vector<16x1xf32> to vector<16x32xf32>
    %138 = arith.mulf %133, %137 : vector<16x32xf32>
    %139 = vector.broadcast %116 : vector<1x32xf32> to vector<16x32xf32>
    %140 = arith.mulf %138, %139 : vector<16x32xf32>
    %141 = vector.broadcast %117 : vector<1x32xf32> to vector<16x32xf32>
    %142 = arith.addf %140, %141 : vector<16x32xf32>
    %c0_42 = arith.constant 0 : index
    %c0_43 = arith.constant 0 : index
    %c0_44 = arith.constant 0 : index
    %143 = vector.load %arg3[%c0_42, %c0_43, %c0_44] : memref<2x33x128xbf16, #tpu.memory_space<vmem>>, vector<1x32x128xbf16>
    %144 = vector.shape_cast %143 : vector<1x32x128xbf16> to vector<32x128xbf16>
    %c0_45 = arith.constant 0 : index
    %c32_46 = arith.constant 32 : index
    %c0_47 = arith.constant 0 : index
    %145 = vector.load %arg3[%c0_45, %c32_46, %c0_47] : memref<2x33x128xbf16, #tpu.memory_space<vmem>>, vector<1x1x128xbf16>
    %146 = vector.shape_cast %145 : vector<1x1x128xbf16> to vector<1x128xbf16>
    %147 = arith.extf %146 : vector<1x128xbf16> to vector<1x128xf32>
    %c0_48 = arith.constant 0 : index
    %c0_49 = arith.constant 0 : index
    %c0_50 = arith.constant 0 : index
    %148 = vector.load %arg4[%c0_48, %c0_49, %c0_50] : memref<2x129x32xbf16, #tpu.memory_space<vmem>>, vector<1x128x32xbf16>
    %149 = vector.shape_cast %148 : vector<1x128x32xbf16> to vector<128x32xbf16>
    %c0_51 = arith.constant 0 : index
    %c128 = arith.constant 128 : index
    %c0_52 = arith.constant 0 : index
    %150 = vector.load %arg4[%c0_51, %c128, %c0_52] : memref<2x129x32xbf16, #tpu.memory_space<vmem>>, vector<1x1x32xbf16>
    %151 = vector.shape_cast %150 : vector<1x1x32xbf16> to vector<1x32xbf16>
    %152 = arith.extf %151 : vector<1x32xbf16> to vector<1x32xf32>
    %153 = arith.truncf %142 : vector<16x32xf32> to vector<16x32xbf16>
    %cst_53 = arith.constant dense<0.000000e+00> : vector<16x128xf32>
    %154 = tpu.matmul %153, %144, %cst_53 {dimension_numbers = #tpu.dot_dimension_numbers<[1], [0], [0], [1], [0, 0, 1, 1], [], []>} : vector<16x32xbf16>, vector<32x128xbf16>, vector<16x128xf32> -> vector<16x128xf32>
    %155 = vector.broadcast %147 : vector<1x128xf32> to vector<16x128xf32>
    %156 = arith.addf %154, %155 : vector<16x128xf32>
    %cst_54 = arith.constant 5.000000e-01 : f32
    %157 = vector.broadcast %cst_54 : f32 to vector<16x128xf32>
    %158 = arith.mulf %157, %156 : vector<16x128xf32>
    %cst_55 = arith.constant 4.471500e-02 : f32
    %159 = vector.broadcast %cst_55 : f32 to vector<16x128xf32>
    %160 = arith.mulf %159, %156 : vector<16x128xf32>
    %161 = arith.mulf %160, %156 : vector<16x128xf32>
    %162 = arith.mulf %161, %156 : vector<16x128xf32>
    %163 = arith.addf %156, %162 : vector<16x128xf32>
    %cst_56 = arith.constant 0.797884583 : f32
    %164 = vector.broadcast %cst_56 : f32 to vector<16x128xf32>
    %165 = arith.mulf %164, %163 : vector<16x128xf32>
    %166 = math.tanh %165 : vector<16x128xf32>
    %cst_57 = arith.constant 1.000000e+00 : f32
    %167 = vector.broadcast %cst_57 : f32 to vector<16x128xf32>
    %168 = arith.addf %167, %166 : vector<16x128xf32>
    %169 = arith.mulf %158, %168 : vector<16x128xf32>
    %170 = arith.truncf %169 : vector<16x128xf32> to vector<16x128xbf16>
    %cst_58 = arith.constant dense<0.000000e+00> : vector<16x32xf32>
    %171 = tpu.matmul %170, %149, %cst_58 {dimension_numbers = #tpu.dot_dimension_numbers<[1], [0], [0], [1], [0, 0, 1, 1], [], []>} : vector<16x128xbf16>, vector<128x32xbf16>, vector<16x32xf32> -> vector<16x32xf32>
    %172 = vector.broadcast %152 : vector<1x32xf32> to vector<16x32xf32>
    %173 = arith.addf %171, %172 : vector<16x32xf32>
    %174 = arith.addf %142, %173 : vector<16x32xf32>
    %cst_59 = arith.constant dense<0.000000e+00> : vector<16xf32>
    %175 = vector.multi_reduction <add>, %174, %cst_59 [1] : vector<16x32xf32> to vector<16xf32>
    %176 = vector.shape_cast %175 : vector<16xf32> to vector<16x1xf32>
    %cst_60 = arith.constant 3.200000e+01 : f32
    %177 = vector.broadcast %cst_60 : f32 to vector<16x1xf32>
    %178 = arith.divf %176, %177 : vector<16x1xf32>
    %179 = vector.broadcast %178 : vector<16x1xf32> to vector<16x32xf32>
    %180 = arith.subf %174, %179 : vector<16x32xf32>
    %181 = arith.mulf %180, %180 : vector<16x32xf32>
    %cst_61 = arith.constant dense<0.000000e+00> : vector<16xf32>
    %182 = vector.multi_reduction <add>, %181, %cst_61 [1] : vector<16x32xf32> to vector<16xf32>
    %183 = vector.shape_cast %182 : vector<16xf32> to vector<16x1xf32>
    %cst_62 = arith.constant 3.200000e+01 : f32
    %184 = vector.broadcast %cst_62 : f32 to vector<16x1xf32>
    %185 = arith.divf %183, %184 : vector<16x1xf32>
    %186 = vector.broadcast %178 : vector<16x1xf32> to vector<16x32xf32>
    %187 = arith.subf %174, %186 : vector<16x32xf32>
    %cst_63 = arith.constant 9.99999974E-6 : f32
    %188 = vector.broadcast %cst_63 : f32 to vector<16x1xf32>
    %189 = arith.addf %185, %188 : vector<16x1xf32>
    %190 = math.rsqrt %189 : vector<16x1xf32>
    %191 = vector.broadcast %190 : vector<16x1xf32> to vector<16x32xf32>
    %192 = arith.mulf %187, %191 : vector<16x32xf32>
    %193 = vector.broadcast %118 : vector<1x32xf32> to vector<16x32xf32>
    %194 = arith.mulf %192, %193 : vector<16x32xf32>
    %195 = vector.broadcast %119 : vector<1x32xf32> to vector<16x32xf32>
    %196 = arith.addf %194, %195 : vector<16x32xf32>
    %c1 = arith.constant 1 : index
    %c0_64 = arith.constant 0 : index
    %c0_65 = arith.constant 0 : index
    %197 = vector.load %arg2[%c1, %c0_64, %c0_65] : memref<2x33x128xbf16, #tpu.memory_space<vmem>>, vector<1x32x96xbf16>
    %198 = vector.shape_cast %197 : vector<1x32x96xbf16> to vector<32x96xbf16>
    %c1_66 = arith.constant 1 : index
    %c0_67 = arith.constant 0 : index
    %c96_68 = arith.constant 96 : index
    %199 = vector.load %arg2[%c1_66, %c0_67, %c96_68] : memref<2x33x128xbf16, #tpu.memory_space<vmem>>, vector<1x32x32xbf16>
    %200 = vector.shape_cast %199 : vector<1x32x32xbf16> to vector<32x32xbf16>
    %c1_69 = arith.constant 1 : index
    %c32_70 = arith.constant 32 : index
    %c0_71 = arith.constant 0 : index
    %201 = vector.load %arg2[%c1_69, %c32_70, %c0_71] : memref<2x33x128xbf16, #tpu.memory_space<vmem>>, vector<1x1x96xbf16>
    %202 = vector.shape_cast %201 : vector<1x1x96xbf16> to vector<1x96xbf16>
    %203 = arith.extf %202 : vector<1x96xbf16> to vector<1x96xf32>
    %c1_72 = arith.constant 1 : index
    %c32_73 = arith.constant 32 : index
    %c96_74 = arith.constant 96 : index
    %204 = vector.load %arg2[%c1_72, %c32_73, %c96_74] : memref<2x33x128xbf16, #tpu.memory_space<vmem>>, vector<1x1x32xbf16>
    %205 = vector.shape_cast %204 : vector<1x1x32xbf16> to vector<1x32xbf16>
    %206 = arith.extf %205 : vector<1x32xbf16> to vector<1x32xf32>
    %207 = arith.truncf %196 : vector<16x32xf32> to vector<16x32xbf16>
    %cst_75 = arith.constant dense<0.000000e+00> : vector<16x96xf32>
    %208 = tpu.matmul %207, %198, %cst_75 {dimension_numbers = #tpu.dot_dimension_numbers<[1], [0], [0], [1], [0, 0, 1, 1], [], []>} : vector<16x32xbf16>, vector<32x96xbf16>, vector<16x96xf32> -> vector<16x96xf32>
    %209 = vector.broadcast %203 : vector<1x96xf32> to vector<16x96xf32>
    %210 = arith.addf %208, %209 : vector<16x96xf32>
    %211 = vector.extract_strided_slice %210 {offsets = [0, 0], sizes = [16, 8], strides = [1, 1]} : vector<16x96xf32> to vector<16x8xf32>
    %212 = arith.truncf %211 : vector<16x8xf32> to vector<16x8xbf16>
    %213 = vector.extract_strided_slice %210 {offsets = [0, 32], sizes = [16, 8], strides = [1, 1]} : vector<16x96xf32> to vector<16x8xf32>
    %214 = arith.truncf %213 : vector<16x8xf32> to vector<16x8xbf16>
    %215 = vector.extract_strided_slice %210 {offsets = [0, 64], sizes = [16, 8], strides = [1, 1]} : vector<16x96xf32> to vector<16x8xf32>
    %216 = arith.truncf %215 : vector<16x8xf32> to vector<16x8xbf16>
    %cst_76 = arith.constant dense<0.000000e+00> : vector<16x16xf32>
    %217 = tpu.matmul %212, %214, %cst_76 {dimension_numbers = #tpu.dot_dimension_numbers<[1], [1], [0], [0], [0, 0, 1, 0], [], []>} : vector<16x8xbf16>, vector<16x8xbf16>, vector<16x16xf32> -> vector<16x16xf32>
    %218 = arith.addf %217, %16 : vector<16x16xf32>
    %cst_77 = arith.constant dense<0xFF800000> : vector<16xf32>
    %219 = vector.multi_reduction <maximumf>, %218, %cst_77 [1] : vector<16x16xf32> to vector<16xf32>
    %220 = vector.shape_cast %219 : vector<16xf32> to vector<16x1xf32>
    %221 = vector.broadcast %220 : vector<16x1xf32> to vector<16x16xf32>
    %222 = arith.subf %218, %221 : vector<16x16xf32>
    %223 = math.exp %222 : vector<16x16xf32>
    %cst_78 = arith.constant dense<0.000000e+00> : vector<16xf32>
    %224 = vector.multi_reduction <add>, %223, %cst_78 [1] : vector<16x16xf32> to vector<16xf32>
    %225 = vector.shape_cast %224 : vector<16xf32> to vector<16x1xf32>
    %226 = arith.truncf %223 : vector<16x16xf32> to vector<16x16xbf16>
    %cst_79 = arith.constant dense<0.000000e+00> : vector<16x8xf32>
    %227 = tpu.matmul %226, %216, %cst_79 {dimension_numbers = #tpu.dot_dimension_numbers<[1], [0], [0], [1], [0, 0, 1, 1], [], []>} : vector<16x16xbf16>, vector<16x8xbf16>, vector<16x8xf32> -> vector<16x8xf32>
    %228 = tpu.reciprocal %225 {approx = true} : vector<16x1xf32> -> vector<16x1xf32>
    %229 = vector.broadcast %228 : vector<16x1xf32> to vector<16x8xf32>
    %230 = arith.mulf %227, %229 : vector<16x8xf32>
    %231 = vector.extract_strided_slice %210 {offsets = [0, 8], sizes = [16, 8], strides = [1, 1]} : vector<16x96xf32> to vector<16x8xf32>
    %232 = arith.truncf %231 : vector<16x8xf32> to vector<16x8xbf16>
    %233 = vector.extract_strided_slice %210 {offsets = [0, 40], sizes = [16, 8], strides = [1, 1]} : vector<16x96xf32> to vector<16x8xf32>
    %234 = arith.truncf %233 : vector<16x8xf32> to vector<16x8xbf16>
    %235 = vector.extract_strided_slice %210 {offsets = [0, 72], sizes = [16, 8], strides = [1, 1]} : vector<16x96xf32> to vector<16x8xf32>
    %236 = arith.truncf %235 : vector<16x8xf32> to vector<16x8xbf16>
    %cst_80 = arith.constant dense<0.000000e+00> : vector<16x16xf32>
    %237 = tpu.matmul %232, %234, %cst_80 {dimension_numbers = #tpu.dot_dimension_numbers<[1], [1], [0], [0], [0, 0, 1, 0], [], []>} : vector<16x8xbf16>, vector<16x8xbf16>, vector<16x16xf32> -> vector<16x16xf32>
    %238 = arith.addf %237, %16 : vector<16x16xf32>
    %cst_81 = arith.constant dense<0xFF800000> : vector<16xf32>
    %239 = vector.multi_reduction <maximumf>, %238, %cst_81 [1] : vector<16x16xf32> to vector<16xf32>
    %240 = vector.shape_cast %239 : vector<16xf32> to vector<16x1xf32>
    %241 = vector.broadcast %240 : vector<16x1xf32> to vector<16x16xf32>
    %242 = arith.subf %238, %241 : vector<16x16xf32>
    %243 = math.exp %242 : vector<16x16xf32>
    %cst_82 = arith.constant dense<0.000000e+00> : vector<16xf32>
    %244 = vector.multi_reduction <add>, %243, %cst_82 [1] : vector<16x16xf32> to vector<16xf32>
    %245 = vector.shape_cast %244 : vector<16xf32> to vector<16x1xf32>
    %246 = arith.truncf %243 : vector<16x16xf32> to vector<16x16xbf16>
    %cst_83 = arith.constant dense<0.000000e+00> : vector<16x8xf32>
    %247 = tpu.matmul %246, %236, %cst_83 {dimension_numbers = #tpu.dot_dimension_numbers<[1], [0], [0], [1], [0, 0, 1, 1], [], []>} : vector<16x16xbf16>, vector<16x8xbf16>, vector<16x8xf32> -> vector<16x8xf32>
    %248 = tpu.reciprocal %245 {approx = true} : vector<16x1xf32> -> vector<16x1xf32>
    %249 = vector.broadcast %248 : vector<16x1xf32> to vector<16x8xf32>
    %250 = arith.mulf %247, %249 : vector<16x8xf32>
    %251 = vector.extract_strided_slice %210 {offsets = [0, 16], sizes = [16, 8], strides = [1, 1]} : vector<16x96xf32> to vector<16x8xf32>
    %252 = arith.truncf %251 : vector<16x8xf32> to vector<16x8xbf16>
    %253 = vector.extract_strided_slice %210 {offsets = [0, 48], sizes = [16, 8], strides = [1, 1]} : vector<16x96xf32> to vector<16x8xf32>
    %254 = arith.truncf %253 : vector<16x8xf32> to vector<16x8xbf16>
    %255 = vector.extract_strided_slice %210 {offsets = [0, 80], sizes = [16, 8], strides = [1, 1]} : vector<16x96xf32> to vector<16x8xf32>
    %256 = arith.truncf %255 : vector<16x8xf32> to vector<16x8xbf16>
    %cst_84 = arith.constant dense<0.000000e+00> : vector<16x16xf32>
    %257 = tpu.matmul %252, %254, %cst_84 {dimension_numbers = #tpu.dot_dimension_numbers<[1], [1], [0], [0], [0, 0, 1, 0], [], []>} : vector<16x8xbf16>, vector<16x8xbf16>, vector<16x16xf32> -> vector<16x16xf32>
    %258 = arith.addf %257, %16 : vector<16x16xf32>
    %cst_85 = arith.constant dense<0xFF800000> : vector<16xf32>
    %259 = vector.multi_reduction <maximumf>, %258, %cst_85 [1] : vector<16x16xf32> to vector<16xf32>
    %260 = vector.shape_cast %259 : vector<16xf32> to vector<16x1xf32>
    %261 = vector.broadcast %260 : vector<16x1xf32> to vector<16x16xf32>
    %262 = arith.subf %258, %261 : vector<16x16xf32>
    %263 = math.exp %262 : vector<16x16xf32>
    %cst_86 = arith.constant dense<0.000000e+00> : vector<16xf32>
    %264 = vector.multi_reduction <add>, %263, %cst_86 [1] : vector<16x16xf32> to vector<16xf32>
    %265 = vector.shape_cast %264 : vector<16xf32> to vector<16x1xf32>
    %266 = arith.truncf %263 : vector<16x16xf32> to vector<16x16xbf16>
    %cst_87 = arith.constant dense<0.000000e+00> : vector<16x8xf32>
    %267 = tpu.matmul %266, %256, %cst_87 {dimension_numbers = #tpu.dot_dimension_numbers<[1], [0], [0], [1], [0, 0, 1, 1], [], []>} : vector<16x16xbf16>, vector<16x8xbf16>, vector<16x8xf32> -> vector<16x8xf32>
    %268 = tpu.reciprocal %265 {approx = true} : vector<16x1xf32> -> vector<16x1xf32>
    %269 = vector.broadcast %268 : vector<16x1xf32> to vector<16x8xf32>
    %270 = arith.mulf %267, %269 : vector<16x8xf32>
    %271 = vector.extract_strided_slice %210 {offsets = [0, 24], sizes = [16, 8], strides = [1, 1]} : vector<16x96xf32> to vector<16x8xf32>
    %272 = arith.truncf %271 : vector<16x8xf32> to vector<16x8xbf16>
    %273 = vector.extract_strided_slice %210 {offsets = [0, 56], sizes = [16, 8], strides = [1, 1]} : vector<16x96xf32> to vector<16x8xf32>
    %274 = arith.truncf %273 : vector<16x8xf32> to vector<16x8xbf16>
    %275 = vector.extract_strided_slice %210 {offsets = [0, 88], sizes = [16, 8], strides = [1, 1]} : vector<16x96xf32> to vector<16x8xf32>
    %276 = arith.truncf %275 : vector<16x8xf32> to vector<16x8xbf16>
    %cst_88 = arith.constant dense<0.000000e+00> : vector<16x16xf32>
    %277 = tpu.matmul %272, %274, %cst_88 {dimension_numbers = #tpu.dot_dimension_numbers<[1], [1], [0], [0], [0, 0, 1, 0], [], []>} : vector<16x8xbf16>, vector<16x8xbf16>, vector<16x16xf32> -> vector<16x16xf32>
    %278 = arith.addf %277, %16 : vector<16x16xf32>
    %cst_89 = arith.constant dense<0xFF800000> : vector<16xf32>
    %279 = vector.multi_reduction <maximumf>, %278, %cst_89 [1] : vector<16x16xf32> to vector<16xf32>
    %280 = vector.shape_cast %279 : vector<16xf32> to vector<16x1xf32>
    %281 = vector.broadcast %280 : vector<16x1xf32> to vector<16x16xf32>
    %282 = arith.subf %278, %281 : vector<16x16xf32>
    %283 = math.exp %282 : vector<16x16xf32>
    %cst_90 = arith.constant dense<0.000000e+00> : vector<16xf32>
    %284 = vector.multi_reduction <add>, %283, %cst_90 [1] : vector<16x16xf32> to vector<16xf32>
    %285 = vector.shape_cast %284 : vector<16xf32> to vector<16x1xf32>
    %286 = arith.truncf %283 : vector<16x16xf32> to vector<16x16xbf16>
    %cst_91 = arith.constant dense<0.000000e+00> : vector<16x8xf32>
    %287 = tpu.matmul %286, %276, %cst_91 {dimension_numbers = #tpu.dot_dimension_numbers<[1], [0], [0], [1], [0, 0, 1, 1], [], []>} : vector<16x16xbf16>, vector<16x8xbf16>, vector<16x8xf32> -> vector<16x8xf32>
    %288 = tpu.reciprocal %285 {approx = true} : vector<16x1xf32> -> vector<16x1xf32>
    %289 = vector.broadcast %288 : vector<16x1xf32> to vector<16x8xf32>
    %290 = arith.mulf %287, %289 : vector<16x8xf32>
    %291 = tpu.concatenate %230, %250, %270, %290 in 1 : vector<16x8xf32>, vector<16x8xf32>, vector<16x8xf32>, vector<16x8xf32> -> vector<16x32xf32>
    %292 = arith.truncf %291 : vector<16x32xf32> to vector<16x32xbf16>
    %cst_92 = arith.constant dense<0.000000e+00> : vector<16x32xf32>
    %293 = tpu.matmul %292, %200, %cst_92 {dimension_numbers = #tpu.dot_dimension_numbers<[1], [0], [0], [1], [0, 0, 1, 1], [], []>} : vector<16x32xbf16>, vector<32x32xbf16>, vector<16x32xf32> -> vector<16x32xf32>
    %294 = vector.broadcast %206 : vector<1x32xf32> to vector<16x32xf32>
    %295 = arith.addf %293, %294 : vector<16x32xf32>
    %c21 = arith.constant 21 : index
    %c0_93 = arith.constant 0 : index
    %296 = vector.load %arg1[%c21, %c0_93] : memref<25x32xf32, #tpu.memory_space<vmem>>, vector<1x32xf32>
    %c22 = arith.constant 22 : index
    %c0_94 = arith.constant 0 : index
    %297 = vector.load %arg1[%c22, %c0_94] : memref<25x32xf32, #tpu.memory_space<vmem>>, vector<1x32xf32>
    %c23 = arith.constant 23 : index
    %c0_95 = arith.constant 0 : index
    %298 = vector.load %arg1[%c23, %c0_95] : memref<25x32xf32, #tpu.memory_space<vmem>>, vector<1x32xf32>
    %c24 = arith.constant 24 : index
    %c0_96 = arith.constant 0 : index
    %299 = vector.load %arg1[%c24, %c0_96] : memref<25x32xf32, #tpu.memory_space<vmem>>, vector<1x32xf32>
    %300 = arith.addf %196, %295 : vector<16x32xf32>
    %cst_97 = arith.constant dense<0.000000e+00> : vector<16xf32>
    %301 = vector.multi_reduction <add>, %300, %cst_97 [1] : vector<16x32xf32> to vector<16xf32>
    %302 = vector.shape_cast %301 : vector<16xf32> to vector<16x1xf32>
    %cst_98 = arith.constant 3.200000e+01 : f32
    %303 = vector.broadcast %cst_98 : f32 to vector<16x1xf32>
    %304 = arith.divf %302, %303 : vector<16x1xf32>
    %305 = vector.broadcast %304 : vector<16x1xf32> to vector<16x32xf32>
    %306 = arith.subf %300, %305 : vector<16x32xf32>
    %307 = arith.mulf %306, %306 : vector<16x32xf32>
    %cst_99 = arith.constant dense<0.000000e+00> : vector<16xf32>
    %308 = vector.multi_reduction <add>, %307, %cst_99 [1] : vector<16x32xf32> to vector<16xf32>
    %309 = vector.shape_cast %308 : vector<16xf32> to vector<16x1xf32>
    %cst_100 = arith.constant 3.200000e+01 : f32
    %310 = vector.broadcast %cst_100 : f32 to vector<16x1xf32>
    %311 = arith.divf %309, %310 : vector<16x1xf32>
    %312 = vector.broadcast %304 : vector<16x1xf32> to vector<16x32xf32>
    %313 = arith.subf %300, %312 : vector<16x32xf32>
    %cst_101 = arith.constant 9.99999974E-6 : f32
    %314 = vector.broadcast %cst_101 : f32 to vector<16x1xf32>
    %315 = arith.addf %311, %314 : vector<16x1xf32>
    %316 = math.rsqrt %315 : vector<16x1xf32>
    %317 = vector.broadcast %316 : vector<16x1xf32> to vector<16x32xf32>
    %318 = arith.mulf %313, %317 : vector<16x32xf32>
    %319 = vector.broadcast %296 : vector<1x32xf32> to vector<16x32xf32>
    %320 = arith.mulf %318, %319 : vector<16x32xf32>
    %321 = vector.broadcast %297 : vector<1x32xf32> to vector<16x32xf32>
    %322 = arith.addf %320, %321 : vector<16x32xf32>
    %c1_102 = arith.constant 1 : index
    %c0_103 = arith.constant 0 : index
    %c0_104 = arith.constant 0 : index
    %323 = vector.load %arg3[%c1_102, %c0_103, %c0_104] : memref<2x33x128xbf16, #tpu.memory_space<vmem>>, vector<1x32x128xbf16>
    %324 = vector.shape_cast %323 : vector<1x32x128xbf16> to vector<32x128xbf16>
    %c1_105 = arith.constant 1 : index
    %c32_106 = arith.constant 32 : index
    %c0_107 = arith.constant 0 : index
    %325 = vector.load %arg3[%c1_105, %c32_106, %c0_107] : memref<2x33x128xbf16, #tpu.memory_space<vmem>>, vector<1x1x128xbf16>
    %326 = vector.shape_cast %325 : vector<1x1x128xbf16> to vector<1x128xbf16>
    %327 = arith.extf %326 : vector<1x128xbf16> to vector<1x128xf32>
    %c1_108 = arith.constant 1 : index
    %c0_109 = arith.constant 0 : index
    %c0_110 = arith.constant 0 : index
    %328 = vector.load %arg4[%c1_108, %c0_109, %c0_110] : memref<2x129x32xbf16, #tpu.memory_space<vmem>>, vector<1x128x32xbf16>
    %329 = vector.shape_cast %328 : vector<1x128x32xbf16> to vector<128x32xbf16>
    %c1_111 = arith.constant 1 : index
    %c128_112 = arith.constant 128 : index
    %c0_113 = arith.constant 0 : index
    %330 = vector.load %arg4[%c1_111, %c128_112, %c0_113] : memref<2x129x32xbf16, #tpu.memory_space<vmem>>, vector<1x1x32xbf16>
    %331 = vector.shape_cast %330 : vector<1x1x32xbf16> to vector<1x32xbf16>
    %332 = arith.extf %331 : vector<1x32xbf16> to vector<1x32xf32>
    %333 = arith.truncf %322 : vector<16x32xf32> to vector<16x32xbf16>
    %cst_114 = arith.constant dense<0.000000e+00> : vector<16x128xf32>
    %334 = tpu.matmul %333, %324, %cst_114 {dimension_numbers = #tpu.dot_dimension_numbers<[1], [0], [0], [1], [0, 0, 1, 1], [], []>} : vector<16x32xbf16>, vector<32x128xbf16>, vector<16x128xf32> -> vector<16x128xf32>
    %335 = vector.broadcast %327 : vector<1x128xf32> to vector<16x128xf32>
    %336 = arith.addf %334, %335 : vector<16x128xf32>
    %cst_115 = arith.constant 5.000000e-01 : f32
    %337 = vector.broadcast %cst_115 : f32 to vector<16x128xf32>
    %338 = arith.mulf %337, %336 : vector<16x128xf32>
    %cst_116 = arith.constant 4.471500e-02 : f32
    %339 = vector.broadcast %cst_116 : f32 to vector<16x128xf32>
    %340 = arith.mulf %339, %336 : vector<16x128xf32>
    %341 = arith.mulf %340, %336 : vector<16x128xf32>
    %342 = arith.mulf %341, %336 : vector<16x128xf32>
    %343 = arith.addf %336, %342 : vector<16x128xf32>
    %cst_117 = arith.constant 0.797884583 : f32
    %344 = vector.broadcast %cst_117 : f32 to vector<16x128xf32>
    %345 = arith.mulf %344, %343 : vector<16x128xf32>
    %346 = math.tanh %345 : vector<16x128xf32>
    %cst_118 = arith.constant 1.000000e+00 : f32
    %347 = vector.broadcast %cst_118 : f32 to vector<16x128xf32>
    %348 = arith.addf %347, %346 : vector<16x128xf32>
    %349 = arith.mulf %338, %348 : vector<16x128xf32>
    %350 = arith.truncf %349 : vector<16x128xf32> to vector<16x128xbf16>
    %cst_119 = arith.constant dense<0.000000e+00> : vector<16x32xf32>
    %351 = tpu.matmul %350, %329, %cst_119 {dimension_numbers = #tpu.dot_dimension_numbers<[1], [0], [0], [1], [0, 0, 1, 1], [], []>} : vector<16x128xbf16>, vector<128x32xbf16>, vector<16x32xf32> -> vector<16x32xf32>
    %352 = vector.broadcast %332 : vector<1x32xf32> to vector<16x32xf32>
    %353 = arith.addf %351, %352 : vector<16x32xf32>
    %354 = arith.addf %322, %353 : vector<16x32xf32>
    %cst_120 = arith.constant dense<0.000000e+00> : vector<16xf32>
    %355 = vector.multi_reduction <add>, %354, %cst_120 [1] : vector<16x32xf32> to vector<16xf32>
    %356 = vector.shape_cast %355 : vector<16xf32> to vector<16x1xf32>
    %cst_121 = arith.constant 3.200000e+01 : f32
    %357 = vector.broadcast %cst_121 : f32 to vector<16x1xf32>
    %358 = arith.divf %356, %357 : vector<16x1xf32>
    %359 = vector.broadcast %358 : vector<16x1xf32> to vector<16x32xf32>
    %360 = arith.subf %354, %359 : vector<16x32xf32>
    %361 = arith.mulf %360, %360 : vector<16x32xf32>
    %cst_122 = arith.constant dense<0.000000e+00> : vector<16xf32>
    %362 = vector.multi_reduction <add>, %361, %cst_122 [1] : vector<16x32xf32> to vector<16xf32>
    %363 = vector.shape_cast %362 : vector<16xf32> to vector<16x1xf32>
    %cst_123 = arith.constant 3.200000e+01 : f32
    %364 = vector.broadcast %cst_123 : f32 to vector<16x1xf32>
    %365 = arith.divf %363, %364 : vector<16x1xf32>
    %366 = vector.broadcast %358 : vector<16x1xf32> to vector<16x32xf32>
    %367 = arith.subf %354, %366 : vector<16x32xf32>
    %cst_124 = arith.constant 9.99999974E-6 : f32
    %368 = vector.broadcast %cst_124 : f32 to vector<16x1xf32>
    %369 = arith.addf %365, %368 : vector<16x1xf32>
    %370 = math.rsqrt %369 : vector<16x1xf32>
    %371 = vector.broadcast %370 : vector<16x1xf32> to vector<16x32xf32>
    %372 = arith.mulf %367, %371 : vector<16x32xf32>
    %373 = vector.broadcast %298 : vector<1x32xf32> to vector<16x32xf32>
    %374 = arith.mulf %372, %373 : vector<16x32xf32>
    %375 = vector.broadcast %299 : vector<1x32xf32> to vector<16x32xf32>
    %376 = arith.addf %374, %375 : vector<16x32xf32>
    %377 = vector.extract_strided_slice %376 {offsets = [0, 0], sizes = [2, 32], strides = [1, 1]} : vector<16x32xf32> to vector<2x32xf32>
    %378 = vector.extract_strided_slice %376 {offsets = [2, 0], sizes = [2, 32], strides = [1, 1]} : vector<16x32xf32> to vector<2x32xf32>
    %379 = vector.extract_strided_slice %376 {offsets = [4, 0], sizes = [2, 32], strides = [1, 1]} : vector<16x32xf32> to vector<2x32xf32>
    %380 = vector.extract_strided_slice %376 {offsets = [6, 0], sizes = [2, 32], strides = [1, 1]} : vector<16x32xf32> to vector<2x32xf32>
    %381 = vector.extract_strided_slice %376 {offsets = [8, 0], sizes = [2, 32], strides = [1, 1]} : vector<16x32xf32> to vector<2x32xf32>
    %382 = vector.extract_strided_slice %376 {offsets = [10, 0], sizes = [2, 32], strides = [1, 1]} : vector<16x32xf32> to vector<2x32xf32>
    %383 = vector.extract_strided_slice %376 {offsets = [12, 0], sizes = [2, 32], strides = [1, 1]} : vector<16x32xf32> to vector<2x32xf32>
    %384 = vector.extract_strided_slice %376 {offsets = [14, 0], sizes = [2, 32], strides = [1, 1]} : vector<16x32xf32> to vector<2x32xf32>
    %385 = tpu.concatenate %377, %378, %379, %380, %381, %382, %383, %384 in 1 : vector<2x32xf32>, vector<2x32xf32>, vector<2x32xf32>, vector<2x32xf32>, vector<2x32xf32>, vector<2x32xf32>, vector<2x32xf32>, vector<2x32xf32> -> vector<2x256xf32>
    %386 = arith.truncf %385 : vector<2x256xf32> to vector<2x256xbf16>
    %c0_125 = arith.constant 0 : index
    %c0_126 = arith.constant 0 : index
    %387 = vector.load %arg5[%c0_125, %c0_126] : memref<257x8xbf16, #tpu.memory_space<vmem>>, vector<256x8xbf16>
    %cst_127 = arith.constant dense<0.000000e+00> : vector<2x8xf32>
    %388 = tpu.matmul %386, %387, %cst_127 {dimension_numbers = #tpu.dot_dimension_numbers<[1], [0], [0], [1], [0, 0, 1, 1], [], []>} : vector<2x256xbf16>, vector<256x8xbf16>, vector<2x8xf32> -> vector<2x8xf32>
    %c256 = arith.constant 256 : index
    %c0_128 = arith.constant 0 : index
    %389 = vector.load %arg5[%c256, %c0_128] : memref<257x8xbf16, #tpu.memory_space<vmem>>, vector<1x8xbf16>
    %390 = arith.extf %389 : vector<1x8xbf16> to vector<1x8xf32>
    %391 = vector.broadcast %390 : vector<1x8xf32> to vector<2x8xf32>
    %392 = arith.addf %388, %391 : vector<2x8xf32>
    %c0_129 = arith.constant 0 : index
    %c0_130 = arith.constant 0 : index
    %393 = vector.load %arg6[%c0_129, %c0_130] : memref<2x8xf32, #tpu.memory_space<vmem>>, vector<2x8xf32>
    tpu.vector_store %arg6[%c0_129, %c0_130], %392 {strides = array<i32>} : memref<2x8xf32, #tpu.memory_space<vmem>>, vector<2x8xf32>,
    return
  }
}

</mosaic_0001>

<llo_original>
// kernel: tsb_forward.1
$region0: #{tsb_forward.1}
  #allocation0 [shape = 'u32[]', space=smem, size = 0x4, offset = 0x4, fixed_abs, tag = 'smem constant byte address 0x4 - core index']
  #allocation1 [shape = 'u32[144,128]{1,0:T(1,128)}', space=vmem, size = 0x12000, scoped, tag = 'internal scratch']
  %s0 = inlined_call_operand.vmem [shape: f32[16,1], index: 0, kind: input, shape index: {}]
  %s1 = inlined_call_operand.vmem [shape: f32[25,32], index: 1, kind: input, shape index: {}]
  %s2 = inlined_call_operand.vmem [shape: bf16[2,33,128], index: 2, kind: input, shape index: {}]
  %s3 = inlined_call_operand.vmem [shape: bf16[2,33,128], index: 3, kind: input, shape index: {}]
  %s4 = inlined_call_operand.vmem [shape: bf16[2,129,32], index: 4, kind: input, shape index: {}]
  %s5 = inlined_call_operand.vmem [shape: bf16[257,8], index: 5, kind: input, shape index: {}]
  %s6 = inlined_call_operand.hbm [shape: f32[2,8], index: 6, kind: output, shape index: {}]
  %s7 = sld [smem:[#allocation0]]
  $region34: #{tsb_forward.1} parent=0
    _
  %s9 = ssub.s32 1, %s7
  %s10 = scalar_select 0, %s9, %s7
  $region1: #{tsb_forward.1} parent=0
    #allocation2 [shape = 'u8[1024]{0}', space=vmem, size = 0x400, scoped, tag = 'output window, operand 0, single buffered']
    #allocation3 [shape = 's32[1]{0}', space=sflag, size = 0x4, scoped, tag = 'scoped memory for tsb_forward.1']
    %11 = vsyncpa [#allocation3], 0
    // Predicated region
    $region2: #{tsb_forward.1} parent=1 // pred_check
      _
    $region3: #{tsb_forward.1} parent=1 // pred_check_branch
      %13 = sbr.rel (0) target = $region5
    $region4: #{tsb_forward.1} parent=1 // pred_region
      _
    $region5: #{tsb_forward.1} parent=1 // pred_fallthru
      _
    // Predicated region
    $region6: #{tsb_forward.1} parent=1 // pred_check
      _
    $region7: #{tsb_forward.1} parent=1 // pred_check_branch
      %15 = sbr.rel (0) target = $region9
    $region8: #{tsb_forward.1} parent=1 // pred_region
      _
    $region9: #{tsb_forward.1} parent=1 // pred_fallthru
      _
    // Predicated region
    $region10: #{tsb_forward.1} parent=1 // pred_check
      _
    $region11: #{tsb_forward.1} parent=1 // pred_check_branch
      %17 = sbr.rel (0) target = $region13
    $region12: #{tsb_forward.1} parent=1 // pred_region
      _
    $region13: #{tsb_forward.1} parent=1 // pred_fallthru
      _
    // Predicated region
    $region14: #{tsb_forward.1} parent=1 // pred_check
      _
    $region15: #{tsb_forward.1} parent=1 // pred_check_branch
      %19 = sbr.rel (0) target = $region17
    $region16: #{tsb_forward.1} parent=1 // pred_region
      _
    $region17: #{tsb_forward.1} parent=1 // pred_fallthru
      _
    // Predicated region
    $region18: #{tsb_forward.1} parent=1 // pred_check
      _
    $region19: #{tsb_forward.1} parent=1 // pred_check_branch
      %21 = sbr.rel (0) target = $region21
    $region20: #{tsb_forward.1} parent=1 // pred_region
      _
    $region21: #{tsb_forward.1} parent=1 // pred_fallthru
      _
    // Predicated region
    $region22: #{tsb_forward.1} parent=1 // pred_check
      _
    $region23: #{tsb_forward.1} parent=1 // pred_check_branch
      %23 = sbr.rel (0) target = $region25
    $region24: #{tsb_forward.1} parent=1 // pred_region
      _
    $region25: #{tsb_forward.1} parent=1 // pred_fallthru
      _
    %v25 = vld [vmem:[%s1] sm:$0xff]
    %v26 = vld [vmem:[%s1 + $0x8] sm:$0xff]
    %v27 = vld [vmem:[%s1 + $0x10] sm:$0x1]
    %v28 = vld [vmem:[%s0] sm:$0xff]
    %v29 = vld [vmem:[%s0 + $0x8] sm:$0xff]
    %31 = vset.pattern.permute.xlu0 0
    %32 = vperm.xlu0 %31, %v28
    %v33 = vpop.permute.xlu0 %32
    %36 = vset.pattern.permute.xlu0 0
    %37 = vperm.xlu0 %36, %v29
    %v38 = vpop.permute.xlu0 %37
    %v40 = vlaneseq
    %v41 = vshrl.u32 %v40, 7
    %v42 = vsub.s32 0, %v41
    %v43 = vrot.slane %v27, %v42
    %v44 = vmul.f32 %v33, %v43
    %v45 = vmul.f32 %v38, %v43
    %v46 = vadd.f32 %v44, %v25
    %v47 = vadd.f32 %v45, %v26
    %v48 = vlaneseq
    %v49 = vshrl.u32 %v48, 7
    %v50 = vadd.s32 %v49, 8
    %v51 = vlaneseq
    %v52 = vand.u32 %v51, 127
    %v53 = vxor.u32 %v49, %v52
    %v54 = vxor.u32 %v50, %v52
    %v55 = vand.u32 %v53, 1
    %v56 = vand.u32 %v54, 1
    %vm57 = vcmp.eq.s32.totalorder %v55, 0
    %vm58 = vcmp.eq.s32.totalorder %v56, 0
    %v59 = vsel %vm57, 0.0, -1e+09
    %v60 = vsel %vm58, 0.0, -1e+09
    %v61 = vld [vmem:[%s2] sm:$0xf]
    %v62 = vld [vmem:[%s2 + $0x4] sm:$0xf]
    %v63 = vld [vmem:[%s2 + $0x8] sm:$0xf]
    %v64 = vld [vmem:[%s2 + $0xc] sm:$0xf]
    %v65 = vld [vmem:[%s2 + $0x10] sm:$0x1]
    %v66 = vunpack.c.l.bf16 %v65
    %v67 = vpack.c.bf16 %v47, %v46
    %v68 = vlaneseq
    %v69 = vshrl.u32 %v68, 7
    %v70 = vsub.s32 0, %v69
    %v71 = vrot.slane %v66, %v70
    %v76 = vunpack.c.l.b16 %v61
    %v77 = vunpack.c.l.b16 %v62
    %v78 = vunpack.c.l.b16 %v63
    %v79 = vunpack.c.l.b16 %v64
    %v80 = vpack.c.b16 %v77, %v76
    %v81 = vpack.c.b16 %v79, %v78
    %vm84 = vcmask 261120
    %v86 = vsel %vm84, %v67, 0
    %88 = vmatprep.subr.bf16.mxu0 0
    %89 = vmatpush1.bf16.msra.mxu0 %v80
    %90 = vmatprep.subr.bf16.mxu0 0
    %91 = vmatpush1.bf16.msra.mxu0 %v81
    %92 = vmatprep.subr.bf16.mxu0 0
    %93 = vmatpush1.bf16.msra.mxu0 0
    %94 = vmatprep.subr.bf16.mxu0 0
    %95 = vmatpush1.bf16.msra.mxu0 0
    %96 = vmatprep.subr.bf16.mxu0 0
    %97 = vmatpush1.bf16.msra.mxu0 0
    %98 = vmatprep.subr.bf16.mxu0 0
    %99 = vmatpush1.bf16.msra.mxu0 0
    %100 = vmatprep.subr.bf16.mxu0 0
    %101 = vmatpush1.bf16.msra.mxu0 0
    %102 = vmatprep.subr.bf16.mxu0 0
    %103 = vmatpush1.bf16.msra.mxu0 0
    %104 = vmatprep.subr.bf16.mxu0 0
    %105 = vmatpush1.bf16.msra.mxu0 0
    %106 = vmatprep.subr.bf16.mxu0 0
    %107 = vmatpush1.bf16.msra.mxu0 0
    %108 = vmatprep.subr.bf16.mxu0 0
    %109 = vmatpush1.bf16.msra.mxu0 0
    %110 = vmatprep.subr.bf16.mxu0 0
    %111 = vmatpush1.bf16.msra.mxu0 0
    %112 = vmatprep.subr.bf16.mxu0 0
    %113 = vmatpush1.bf16.msra.mxu0 0
    %114 = vmatprep.subr.bf16.mxu0 0
    %115 = vmatpush1.bf16.msra.mxu0 0
    %116 = vmatprep.subr.bf16.mxu0 0
    %117 = vmatpush1.bf16.msra.mxu0 0
    %118 = vmatprep.subr.bf16.mxu0 0
    %119 = vmatpush1.bf16.msra.mxu0 0
    %120 = vmatprep.mubr.bf16.mxu0 0
    %121 = vmatmul.mubr.bf16.gmra.mrb[0].mxu0 %v86
    %v122 = vpop.f32.mrb[0].mxu0
    %v123 = vadd.f32 %v71, %v122
    %v124 = vpop.f32.mrb[0].mxu0
    %v125 = vpop.f32.mrb[0].mxu0
    %v126 = vadd.f32 %v71, %v125
    %v127 = vpop.f32.mrb[0].mxu0
    %128 = vdwg.mxu0
    %v129 = vpack.c.bf16 %v126, %v123
    %131 = vrot.lane.b32.xlu0 %v129, 96
    %v132 = vpop.permute.xlu0 %131
    %vm133 = vcmask 64512
    %v135 = vsel %vm133, %v129, 0
    %v138 = vsel %vm133, %v132, 0
    %140 = vmatprep.subr.bf16.mxu0 0
    %141 = vmatpush1.bf16.xpose.msra.mxu0 %v138
    %142 = vmatprep.subr.bf16.mxu0 0
    %143 = vmatpush1.bf16.xpose.msra.mxu0 0
    %144 = vmatprep.subr.bf16.mxu0 0
    %145 = vmatpush1.bf16.xpose.msra.mxu0 0
    %146 = vmatprep.subr.bf16.mxu0 0
    %147 = vmatpush1.bf16.xpose.msra.mxu0 0
    %148 = vmatprep.subr.bf16.mxu0 0
    %149 = vmatpush1.bf16.xpose.msra.mxu0 0
    %150 = vmatprep.subr.bf16.mxu0 0
    %151 = vmatpush1.bf16.xpose.msra.mxu0 0
    %152 = vmatprep.subr.bf16.mxu0 0
    %153 = vmatpush1.bf16.xpose.msra.mxu0 0
    %154 = vmatprep.subr.bf16.mxu0 0
    %155 = vmatpush1.bf16.xpose.msra.mxu0 0
    %156 = vmatprep.subr.bf16.mxu0 0
    %157 = vmatpush1.bf16.xpose.msra.mxu0 0
    %158 = vmatprep.subr.bf16.mxu0 0
    %159 = vmatpush1.bf16.xpose.msra.mxu0 0
    %160 = vmatprep.subr.bf16.mxu0 0
    %161 = vmatpush1.bf16.xpose.msra.mxu0 0
    %162 = vmatprep.subr.bf16.mxu0 0
    %163 = vmatpush1.bf16.xpose.msra.mxu0 0
    %164 = vmatprep.subr.bf16.mxu0 0
    %165 = vmatpush1.bf16.xpose.msra.mxu0 0
    %166 = vmatprep.subr.bf16.mxu0 0
    %167 = vmatpush1.bf16.xpose.msra.mxu0 0
    %168 = vmatprep.subr.bf16.mxu0 0
    %169 = vmatpush1.bf16.xpose.msra.mxu0 0
    %170 = vmatprep.subr.bf16.mxu0 0
    %171 = vmatpush1.bf16.xpose.msra.mxu0 0
    %172 = vmatprep.mubr.bf16.mxu0 0
    %173 = vmatmul.mubr.bf16.gmra.mrb[0].mxu0 %v135
    %v174 = vpop.f32.mrb[0].mxu0
    %v175 = vadd.f32 %v59, %v174
    %v176 = vpop.f32.mrb[0].mxu0
    %v177 = vpop.f32.mrb[0].mxu0
    %v178 = vadd.f32 %v60, %v177
    %v179 = vpop.f32.mrb[0].mxu0
    %180 = vdwg.mxu0
    %vm181 = vcmask 130048
    %v182 = vsel %vm181, %v175, -inf
    %183 = vmax.xlane.f32.xlu0 %v182
    %v184 = vpop.xlane.xlu0 %183
    %v185 = vsel %vm181, %v178, -inf
    %186 = vmax.xlane.f32.xlu0 %v185
    %v187 = vpop.xlane.xlu0 %186
    %v188 = vsub.f32 %v175, %v184
    %v189 = vsub.f32 %v178, %v187
    %v190 = vmul.f32 %v188, 1.442695
    %v191 = vpow.pop %v190
    %v192 = vmul.f32 %v189, 1.442695
    %v193 = vpow.pop %v192
    %v194 = vsel %vm181, %v191, 0.0
    %195 = vadd.xlane.f32.xlu0 %v194
    %v196 = vpop.xlane.xlu0 %195
    %v197 = vsel %vm181, %v193, 0.0
    %198 = vadd.xlane.f32.xlu0 %v197
    %v199 = vpop.xlane.xlu0 %198
    %v200 = vpack.c.bf16 %v193, %v191
    %201 = vrot.lane.b32.xlu0 %v129, 64
    %v202 = vpop.permute.xlu0 %201
    %v205 = vsel %vm181, %v200, 0
    %207 = vmatprep.subr.bf16.mxu0 0
    %208 = vmatpush1.bf16.msra.mxu0 %v202
    %209 = vmatprep.subr.bf16.mxu0 0
    %210 = vmatpush1.bf16.msra.mxu0 0
    %211 = vmatprep.subr.bf16.mxu0 0
    %212 = vmatpush1.bf16.msra.mxu0 0
    %213 = vmatprep.subr.bf16.mxu0 0
    %214 = vmatpush1.bf16.msra.mxu0 0
    %215 = vmatprep.subr.bf16.mxu0 0
    %216 = vmatpush1.bf16.msra.mxu0 0
    %217 = vmatprep.subr.bf16.mxu0 0
    %218 = vmatpush1.bf16.msra.mxu0 0
    %219 = vmatprep.subr.bf16.mxu0 0
    %220 = vmatpush1.bf16.msra.mxu0 0
    %221 = vmatprep.subr.bf16.mxu0 0
    %222 = vmatpush1.bf16.msra.mxu0 0
    %223 = vmatprep.subr.bf16.mxu0 0
    %224 = vmatpush1.bf16.msra.mxu0 0
    %225 = vmatprep.subr.bf16.mxu0 0
    %226 = vmatpush1.bf16.msra.mxu0 0
    %227 = vmatprep.subr.bf16.mxu0 0
    %228 = vmatpush1.bf16.msra.mxu0 0
    %229 = vmatprep.subr.bf16.mxu0 0
    %230 = vmatpush1.bf16.msra.mxu0 0
    %231 = vmatprep.subr.bf16.mxu0 0
    %232 = vmatpush1.bf16.msra.mxu0 0
    %233 = vmatprep.subr.bf16.mxu0 0
    %234 = vmatpush1.bf16.msra.mxu0 0
    %235 = vmatprep.subr.bf16.mxu0 0
    %236 = vmatpush1.bf16.msra.mxu0 0
    %237 = vmatprep.subr.bf16.mxu0 0
    %238 = vmatpush1.bf16.msra.mxu0 0
    %239 = vmatprep.mubr.bf16.mxu0 0
    %240 = vmatmul.mubr.bf16.gmra.mrb[0].mxu0 %v205
    %v241 = vpop.f32.mrb[0].mxu0
    %v242 = vadd.f32 0.0, %v241
    %v243 = vpop.f32.mrb[0].mxu0
    %v244 = vpop.f32.mrb[0].mxu0
    %v245 = vadd.f32 0.0, %v244
    %v246 = vpop.f32.mrb[0].mxu0
    %247 = vdwg.mxu0
    %v248 = vrcp.pop %v196
    %v249 = vrcp.pop %v199
    %v250 = vmul.f32 %v242, %v248
    %v251 = vmul.f32 %v245, %v249
    %252 = vrot.lane.b32.xlu0 %v129, 120
    %v253 = vpop.permute.xlu0 %252
    %254 = vrot.lane.b32.xlu0 %v129, 88
    %v255 = vpop.permute.xlu0 %254
    %v257 = vsel %vm133, %v253, 0
    %v260 = vsel %vm133, %v255, 0
    %262 = vmatprep.subr.bf16.mxu0 0
    %263 = vmatpush1.bf16.xpose.msra.mxu0 %v260
    %264 = vmatprep.subr.bf16.mxu0 0
    %265 = vmatpush1.bf16.xpose.msra.mxu0 0
    %266 = vmatprep.subr.bf16.mxu0 0
    %267 = vmatpush1.bf16.xpose.msra.mxu0 0
    %268 = vmatprep.subr.bf16.mxu0 0
    %269 = vmatpush1.bf16.xpose.msra.mxu0 0
    %270 = vmatprep.subr.bf16.mxu0 0
    %271 = vmatpush1.bf16.xpose.msra.mxu0 0
    %272 = vmatprep.subr.bf16.mxu0 0
    %273 = vmatpush1.bf16.xpose.msra.mxu0 0
    %274 = vmatprep.subr.bf16.mxu0 0
    %275 = vmatpush1.bf16.xpose.msra.mxu0 0
    %276 = vmatprep.subr.bf16.mxu0 0
    %277 = vmatpush1.bf16.xpose.msra.mxu0 0
    %278 = vmatprep.subr.bf16.mxu0 0
    %279 = vmatpush1.bf16.xpose.msra.mxu0 0
    %280 = vmatprep.subr.bf16.mxu0 0
    %281 = vmatpush1.bf16.xpose.msra.mxu0 0
    %282 = vmatprep.subr.bf16.mxu0 0
    %283 = vmatpush1.bf16.xpose.msra.mxu0 0
    %284 = vmatprep.subr.bf16.mxu0 0
    %285 = vmatpush1.bf16.xpose.msra.mxu0 0
    %286 = vmatprep.subr.bf16.mxu0 0
    %287 = vmatpush1.bf16.xpose.msra.mxu0 0
    %288 = vmatprep.subr.bf16.mxu0 0
    %289 = vmatpush1.bf16.xpose.msra.mxu0 0
    %290 = vmatprep.subr.bf16.mxu0 0
    %291 = vmatpush1.bf16.xpose.msra.mxu0 0
    %292 = vmatprep.subr.bf16.mxu0 0
    %293 = vmatpush1.bf16.xpose.msra.mxu0 0
    %294 = vmatprep.mubr.bf16.mxu0 0
    %295 = vmatmul.mubr.bf16.gmra.mrb[0].mxu0 %v257
    %v296 = vpop.f32.mrb[0].mxu0
    %v297 = vadd.f32 %v59, %v296
    %v298 = vpop.f32.mrb[0].mxu0
    %v299 = vpop.f32.mrb[0].mxu0
    %v300 = vadd.f32 %v60, %v299
    %v301 = vpop.f32.mrb[0].mxu0
    %302 = vdwg.mxu0
    %v303 = vsel %vm181, %v297, -inf
    %304 = vmax.xlane.f32.xlu0 %v303
    %v305 = vpop.xlane.xlu0 %304
    %v306 = vsel %vm181, %v300, -inf
    %307 = vmax.xlane.f32.xlu0 %v306
    %v308 = vpop.xlane.xlu0 %307
    %v309 = vsub.f32 %v297, %v305
    %v310 = vsub.f32 %v300, %v308
    %v311 = vmul.f32 %v309, 1.442695
    %v312 = vpow.pop %v311
    %v313 = vmul.f32 %v310, 1.442695
    %v314 = vpow.pop %v313
    %v315 = vsel %vm181, %v312, 0.0
    %316 = vadd.xlane.f32.xlu0 %v315
    %v317 = vpop.xlane.xlu0 %316
    %v318 = vsel %vm181, %v314, 0.0
    %319 = vadd.xlane.f32.xlu0 %v318
    %v320 = vpop.xlane.xlu0 %319
    %v321 = vpack.c.bf16 %v314, %v312
    %322 = vrot.lane.b32.xlu0 %v129, 56
    %v323 = vpop.permute.xlu0 %322
    %v326 = vsel %vm181, %v321, 0
    %328 = vmatprep.subr.bf16.mxu0 0
    %329 = vmatpush1.bf16.msra.mxu0 %v323
    %330 = vmatprep.subr.bf16.mxu0 0
    %331 = vmatpush1.bf16.msra.mxu0 0
    %332 = vmatprep.subr.bf16.mxu0 0
    %333 = vmatpush1.bf16.msra.mxu0 0
    %334 = vmatprep.subr.bf16.mxu0 0
    %335 = vmatpush1.bf16.msra.mxu0 0
    %336 = vmatprep.subr.bf16.mxu0 0
    %337 = vmatpush1.bf16.msra.mxu0 0
    %338 = vmatprep.subr.bf16.mxu0 0
    %339 = vmatpush1.bf16.msra.mxu0 0
    %340 = vmatprep.subr.bf16.mxu0 0
    %341 = vmatpush1.bf16.msra.mxu0 0
    %342 = vmatprep.subr.bf16.mxu0 0
    %343 = vmatpush1.bf16.msra.mxu0 0
    %344 = vmatprep.subr.bf16.mxu0 0
    %345 = vmatpush1.bf16.msra.mxu0 0
    %346 = vmatprep.subr.bf16.mxu0 0
    %347 = vmatpush1.bf16.msra.mxu0 0
    %348 = vmatprep.subr.bf16.mxu0 0
    %349 = vmatpush1.bf16.msra.mxu0 0
    %350 = vmatprep.subr.bf16.mxu0 0
    %351 = vmatpush1.bf16.msra.mxu0 0
    %352 = vmatprep.subr.bf16.mxu0 0
    %353 = vmatpush1.bf16.msra.mxu0 0
    %354 = vmatprep.subr.bf16.mxu0 0
    %355 = vmatpush1.bf16.msra.mxu0 0
    %356 = vmatprep.subr.bf16.mxu0 0
    %357 = vmatpush1.bf16.msra.mxu0 0
    %358 = vmatprep.subr.bf16.mxu0 0
    %359 = vmatpush1.bf16.msra.mxu0 0
    %360 = vmatprep.mubr.bf16.mxu0 0
    %361 = vmatmul.mubr.bf16.gmra.mrb[0].mxu0 %v326
    %v362 = vpop.f32.mrb[0].mxu0
    %v363 = vadd.f32 0.0, %v362
    %v364 = vpop.f32.mrb[0].mxu0
    %v365 = vpop.f32.mrb[0].mxu0
    %v366 = vadd.f32 0.0, %v365
    %v367 = vpop.f32.mrb[0].mxu0
    %368 = vdwg.mxu0
    %v369 = vrcp.pop %v317
    %v370 = vrcp.pop %v320
    %v371 = vmul.f32 %v363, %v369
    %v372 = vmul.f32 %v366, %v370
    %373 = vrot.lane.b32.xlu0 %v129, 112
    %v374 = vpop.permute.xlu0 %373
    %375 = vrot.lane.b32.xlu0 %v129, 80
    %v376 = vpop.permute.xlu0 %375
    %v378 = vsel %vm133, %v374, 0
    %v381 = vsel %vm133, %v376, 0
    %383 = vmatprep.subr.bf16.mxu0 0
    %384 = vmatpush1.bf16.xpose.msra.mxu0 %v381
    %385 = vmatprep.subr.bf16.mxu0 0
    %386 = vmatpush1.bf16.xpose.msra.mxu0 0
    %387 = vmatprep.subr.bf16.mxu0 0
    %388 = vmatpush1.bf16.xpose.msra.mxu0 0
    %389 = vmatprep.subr.bf16.mxu0 0
    %390 = vmatpush1.bf16.xpose.msra.mxu0 0
    %391 = vmatprep.subr.bf16.mxu0 0
    %392 = vmatpush1.bf16.xpose.msra.mxu0 0
    %393 = vmatprep.subr.bf16.mxu0 0
    %394 = vmatpush1.bf16.xpose.msra.mxu0 0
    %395 = vmatprep.subr.bf16.mxu0 0
    %396 = vmatpush1.bf16.xpose.msra.mxu0 0
    %397 = vmatprep.subr.bf16.mxu0 0
    %398 = vmatpush1.bf16.xpose.msra.mxu0 0
    %399 = vmatprep.subr.bf16.mxu0 0
    %400 = vmatpush1.bf16.xpose.msra.mxu0 0
    %401 = vmatprep.subr.bf16.mxu0 0
    %402 = vmatpush1.bf16.xpose.msra.mxu0 0
    %403 = vmatprep.subr.bf16.mxu0 0
    %404 = vmatpush1.bf16.xpose.msra.mxu0 0
    %405 = vmatprep.subr.bf16.mxu0 0
    %406 = vmatpush1.bf16.xpose.msra.mxu0 0
    %407 = vmatprep.subr.bf16.mxu0 0
    %408 = vmatpush1.bf16.xpose.msra.mxu0 0
    %409 = vmatprep.subr.bf16.mxu0 0
    %410 = vmatpush1.bf16.xpose.msra.mxu0 0
    %411 = vmatprep.subr.bf16.mxu0 0
    %412 = vmatpush1.bf16.xpose.msra.mxu0 0
    %413 = vmatprep.subr.bf16.mxu0 0
    %414 = vmatpush1.bf16.xpose.msra.mxu0 0
    %415 = vmatprep.mubr.bf16.mxu0 0
    %416 = vmatmul.mubr.bf16.gmra.mrb[0].mxu0 %v378
    %v417 = vpop.f32.mrb[0].mxu0
    %v418 = vadd.f32 %v59, %v417
    %v419 = vpop.f32.mrb[0].mxu0
    %v420 = vpop.f32.mrb[0].mxu0
    %v421 = vadd.f32 %v60, %v420
    %v422 = vpop.f32.mrb[0].mxu0
    %423 = vdwg.mxu0
    %v424 = vsel %vm181, %v418, -inf
    %425 = vmax.xlane.f32.xlu0 %v424
    %v426 = vpop.xlane.xlu0 %425
    %v427 = vsel %vm181, %v421, -inf
    %428 = vmax.xlane.f32.xlu0 %v427
    %v429 = vpop.xlane.xlu0 %428
    %v430 = vsub.f32 %v418, %v426
    %v431 = vsub.f32 %v421, %v429
    %v432 = vmul.f32 %v430, 1.442695
    %v433 = vpow.pop %v432
    %v434 = vmul.f32 %v431, 1.442695
    %v435 = vpow.pop %v434
    %v436 = vsel %vm181, %v433, 0.0
    %437 = vadd.xlane.f32.xlu0 %v436
    %v438 = vpop.xlane.xlu0 %437
    %v439 = vsel %vm181, %v435, 0.0
    %440 = vadd.xlane.f32.xlu0 %v439
    %v441 = vpop.xlane.xlu0 %440
    %v442 = vpack.c.bf16 %v435, %v433
    %443 = vrot.lane.b32.xlu0 %v129, 48
    %v444 = vpop.permute.xlu0 %443
    %v447 = vsel %vm181, %v442, 0
    %449 = vmatprep.subr.bf16.mxu0 0
    %450 = vmatpush1.bf16.msra.mxu0 %v444
    %451 = vmatprep.subr.bf16.mxu0 0
    %452 = vmatpush1.bf16.msra.mxu0 0
    %453 = vmatprep.subr.bf16.mxu0 0
    %454 = vmatpush1.bf16.msra.mxu0 0
    %455 = vmatprep.subr.bf16.mxu0 0
    %456 = vmatpush1.bf16.msra.mxu0 0
    %457 = vmatprep.subr.bf16.mxu0 0
    %458 = vmatpush1.bf16.msra.mxu0 0
    %459 = vmatprep.subr.bf16.mxu0 0
    %460 = vmatpush1.bf16.msra.mxu0 0
    %461 = vmatprep.subr.bf16.mxu0 0
    %462 = vmatpush1.bf16.msra.mxu0 0
    %463 = vmatprep.subr.bf16.mxu0 0
    %464 = vmatpush1.bf16.msra.mxu0 0
    %465 = vmatprep.subr.bf16.mxu0 0
    %466 = vmatpush1.bf16.msra.mxu0 0
    %467 = vmatprep.subr.bf16.mxu0 0
    %468 = vmatpush1.bf16.msra.mxu0 0
    %469 = vmatprep.subr.bf16.mxu0 0
    %470 = vmatpush1.bf16.msra.mxu0 0
    %471 = vmatprep.subr.bf16.mxu0 0
    %472 = vmatpush1.bf16.msra.mxu0 0
    %473 = vmatprep.subr.bf16.mxu0 0
    %474 = vmatpush1.bf16.msra.mxu0 0
    %475 = vmatprep.subr.bf16.mxu0 0
    %476 = vmatpush1.bf16.msra.mxu0 0
    %477 = vmatprep.subr.bf16.mxu0 0
    %478 = vmatpush1.bf16.msra.mxu0 0
    %479 = vmatprep.subr.bf16.mxu0 0
    %480 = vmatpush1.bf16.msra.mxu0 0
    %481 = vmatprep.mubr.bf16.mxu0 0
    %482 = vmatmul.mubr.bf16.gmra.mrb[0].mxu0 %v447
    %v483 = vpop.f32.mrb[0].mxu0
    %v484 = vadd.f32 0.0, %v483
    %v485 = vpop.f32.mrb[0].mxu0
    %v486 = vpop.f32.mrb[0].mxu0
    %v487 = vadd.f32 0.0, %v486
    %v488 = vpop.f32.mrb[0].mxu0
    %489 = vdwg.mxu0
    %v490 = vrcp.pop %v438
    %v491 = vrcp.pop %v441
    %v492 = vmul.f32 %v484, %v490
    %v493 = vmul.f32 %v487, %v491
    %494 = vrot.lane.b32.xlu0 %v129, 104
    %v495 = vpop.permute.xlu0 %494
    %496 = vrot.lane.b32.xlu0 %v129, 72
    %v497 = vpop.permute.xlu0 %496
    %v499 = vsel %vm133, %v495, 0
    %v502 = vsel %vm133, %v497, 0
    %504 = vmatprep.subr.bf16.mxu0 0
    %505 = vmatpush1.bf16.xpose.msra.mxu0 %v502
    %506 = vmatprep.subr.bf16.mxu0 0
    %507 = vmatpush1.bf16.xpose.msra.mxu0 0
    %508 = vmatprep.subr.bf16.mxu0 0
    %509 = vmatpush1.bf16.xpose.msra.mxu0 0
    %510 = vmatprep.subr.bf16.mxu0 0
    %511 = vmatpush1.bf16.xpose.msra.mxu0 0
    %512 = vmatprep.subr.bf16.mxu0 0
    %513 = vmatpush1.bf16.xpose.msra.mxu0 0
    %514 = vmatprep.subr.bf16.mxu0 0
    %515 = vmatpush1.bf16.xpose.msra.mxu0 0
    %516 = vmatprep.subr.bf16.mxu0 0
    %517 = vmatpush1.bf16.xpose.msra.mxu0 0
    %518 = vmatprep.subr.bf16.mxu0 0
    %519 = vmatpush1.bf16.xpose.msra.mxu0 0
    %520 = vmatprep.subr.bf16.mxu0 0
    %521 = vmatpush1.bf16.xpose.msra.mxu0 0
    %522 = vmatprep.subr.bf16.mxu0 0
    %523 = vmatpush1.bf16.xpose.msra.mxu0 0
    %524 = vmatprep.subr.bf16.mxu0 0
    %525 = vmatpush1.bf16.xpose.msra.mxu0 0
    %526 = vmatprep.subr.bf16.mxu0 0
    %527 = vmatpush1.bf16.xpose.msra.mxu0 0
    %528 = vmatprep.subr.bf16.mxu0 0
    %529 = vmatpush1.bf16.xpose.msra.mxu0 0
    %530 = vmatprep.subr.bf16.mxu0 0
    %531 = vmatpush1.bf16.xpose.msra.mxu0 0
    %532 = vmatprep.subr.bf16.mxu0 0
    %533 = vmatpush1.bf16.xpose.msra.mxu0 0
    %534 = vmatprep.subr.bf16.mxu0 0
    %535 = vmatpush1.bf16.xpose.msra.mxu0 0
    %536 = vmatprep.mubr.bf16.mxu0 0
    %537 = vmatmul.mubr.bf16.gmra.mrb[0].mxu0 %v499
    %v538 = vpop.f32.mrb[0].mxu0
    %v539 = vadd.f32 %v59, %v538
    %v540 = vpop.f32.mrb[0].mxu0
    %v541 = vpop.f32.mrb[0].mxu0
    %v542 = vadd.f32 %v60, %v541
    %v543 = vpop.f32.mrb[0].mxu0
    %544 = vdwg.mxu0
    %v545 = vsel %vm181, %v539, -inf
    %546 = vmax.xlane.f32.xlu0 %v545
    %v547 = vpop.xlane.xlu0 %546
    %v548 = vsel %vm181, %v542, -inf
    %549 = vmax.xlane.f32.xlu0 %v548
    %v550 = vpop.xlane.xlu0 %549
    %v551 = vsub.f32 %v539, %v547
    %v552 = vsub.f32 %v542, %v550
    %v553 = vmul.f32 %v551, 1.442695
    %v554 = vpow.pop %v553
    %v555 = vmul.f32 %v552, 1.442695
    %v556 = vpow.pop %v555
    %v557 = vsel %vm181, %v554, 0.0
    %558 = vadd.xlane.f32.xlu0 %v557
    %v559 = vpop.xlane.xlu0 %558
    %v560 = vsel %vm181, %v556, 0.0
    %561 = vadd.xlane.f32.xlu0 %v560
    %v562 = vpop.xlane.xlu0 %561
    %v563 = vpack.c.bf16 %v556, %v554
    %564 = vrot.lane.b32.xlu0 %v129, 40
    %v565 = vpop.permute.xlu0 %564
    %v568 = vsel %vm181, %v563, 0
    %570 = vmatprep.subr.bf16.mxu0 0
    %571 = vmatpush1.bf16.msra.mxu0 %v565
    %572 = vmatprep.subr.bf16.mxu0 0
    %573 = vmatpush1.bf16.msra.mxu0 0
    %574 = vmatprep.subr.bf16.mxu0 0
    %575 = vmatpush1.bf16.msra.mxu0 0
    %576 = vmatprep.subr.bf16.mxu0 0
    %577 = vmatpush1.bf16.msra.mxu0 0
    %578 = vmatprep.subr.bf16.mxu0 0
    %579 = vmatpush1.bf16.msra.mxu0 0
    %580 = vmatprep.subr.bf16.mxu0 0
    %581 = vmatpush1.bf16.msra.mxu0 0
    %582 = vmatprep.subr.bf16.mxu0 0
    %583 = vmatpush1.bf16.msra.mxu0 0
    %584 = vmatprep.subr.bf16.mxu0 0
    %585 = vmatpush1.bf16.msra.mxu0 0
    %586 = vmatprep.subr.bf16.mxu0 0
    %587 = vmatpush1.bf16.msra.mxu0 0
    %588 = vmatprep.subr.bf16.mxu0 0
    %589 = vmatpush1.bf16.msra.mxu0 0
    %590 = vmatprep.subr.bf16.mxu0 0
    %591 = vmatpush1.bf16.msra.mxu0 0
    %592 = vmatprep.subr.bf16.mxu0 0
    %593 = vmatpush1.bf16.msra.mxu0 0
    %594 = vmatprep.subr.bf16.mxu0 0
    %595 = vmatpush1.bf16.msra.mxu0 0
    %596 = vmatprep.subr.bf16.mxu0 0
    %597 = vmatpush1.bf16.msra.mxu0 0
    %598 = vmatprep.subr.bf16.mxu0 0
    %599 = vmatpush1.bf16.msra.mxu0 0
    %600 = vmatprep.subr.bf16.mxu0 0
    %601 = vmatpush1.bf16.msra.mxu0 0
    %602 = vmatprep.mubr.bf16.mxu0 0
    %603 = vmatmul.mubr.bf16.gmra.mrb[0].mxu0 %v568
    %v604 = vpop.f32.mrb[0].mxu0
    %v605 = vadd.f32 0.0, %v604
    %v606 = vpop.f32.mrb[0].mxu0
    %v607 = vpop.f32.mrb[0].mxu0
    %v608 = vadd.f32 0.0, %v607
    %v609 = vpop.f32.mrb[0].mxu0
    %610 = vdwg.mxu0
    %v611 = vrcp.pop %v559
    %v612 = vrcp.pop %v562
    %v613 = vmul.f32 %v605, %v611
    %v614 = vmul.f32 %v608, %v612
    %617 = vrot.lane.b32.xlu0 %v371, 8
    %v618 = vpop.permute.xlu0 %617
    %619 = vrot.lane.b32.xlu0 %v372, 8
    %v620 = vpop.permute.xlu0 %619
    %625 = vrot.lane.b32.xlu0 %v492, 16
    %v626 = vpop.permute.xlu0 %625
    %627 = vrot.lane.b32.xlu0 %v493, 16
    %v628 = vpop.permute.xlu0 %627
    %633 = vrot.lane.b32.xlu0 %v613, 24
    %v634 = vpop.permute.xlu0 %633
    %635 = vrot.lane.b32.xlu0 %v614, 24
    %v636 = vpop.permute.xlu0 %635
    %v639 = vsel %vm133, %v250, %v618
    %v640 = vsel %vm133, %v251, %v620
    %v641 = vsel %vm181, %v639, %v626
    %v642 = vsel %vm181, %v640, %v628
    %vm643 = vcmask 195584
    %v644 = vsel %vm643, %v641, %v634
    %v645 = vsel %vm643, %v642, %v636
    %v646 = vpack.c.bf16 %v645, %v644
    %647 = vrot.lane.b32.xlu0 %v80, 32
    %v648 = vpop.permute.xlu0 %647
    %649 = vrot.lane.b32.xlu0 %v81, 32
    %v650 = vpop.permute.xlu0 %649
    %654 = vrot.lane.b32.xlu0 %v71, 32
    %v655 = vpop.permute.xlu0 %654
    %v658 = vsel %vm84, %v646, 0
    %660 = vmatprep.subr.bf16.mxu0 0
    %661 = vmatpush1.bf16.msra.mxu0 %v648
    %662 = vmatprep.subr.bf16.mxu0 0
    %663 = vmatpush1.bf16.msra.mxu0 %v650
    %664 = vmatprep.subr.bf16.mxu0 0
    %665 = vmatpush1.bf16.msra.mxu0 0
    %666 = vmatprep.subr.bf16.mxu0 0
    %667 = vmatpush1.bf16.msra.mxu0 0
    %668 = vmatprep.subr.bf16.mxu0 0
    %669 = vmatpush1.bf16.msra.mxu0 0
    %670 = vmatprep.subr.bf16.mxu0 0
    %671 = vmatpush1.bf16.msra.mxu0 0
    %672 = vmatprep.subr.bf16.mxu0 0
    %673 = vmatpush1.bf16.msra.mxu0 0
    %674 = vmatprep.subr.bf16.mxu0 0
    %675 = vmatpush1.bf16.msra.mxu0 0
    %676 = vmatprep.subr.bf16.mxu0 0
    %677 = vmatpush1.bf16.msra.mxu0 0
    %678 = vmatprep.subr.bf16.mxu0 0
    %679 = vmatpush1.bf16.msra.mxu0 0
    %680 = vmatprep.subr.bf16.mxu0 0
    %681 = vmatpush1.bf16.msra.mxu0 0
    %682 = vmatprep.subr.bf16.mxu0 0
    %683 = vmatpush1.bf16.msra.mxu0 0
    %684 = vmatprep.subr.bf16.mxu0 0
    %685 = vmatpush1.bf16.msra.mxu0 0
    %686 = vmatprep.subr.bf16.mxu0 0
    %687 = vmatpush1.bf16.msra.mxu0 0
    %688 = vmatprep.subr.bf16.mxu0 0
    %689 = vmatpush1.bf16.msra.mxu0 0
    %690 = vmatprep.subr.bf16.mxu0 0
    %691 = vmatpush1.bf16.msra.mxu0 0
    %692 = vmatprep.mubr.bf16.mxu0 0
    %693 = vmatmul.mubr.bf16.gmra.mrb[0].mxu0 %v658
    %v694 = vpop.f32.mrb[0].mxu0
    %v695 = vadd.f32 %v655, %v694
    %v696 = vpop.f32.mrb[0].mxu0
    %v697 = vpop.f32.mrb[0].mxu0
    %v698 = vadd.f32 %v655, %v697
    %v699 = vpop.f32.mrb[0].mxu0
    %700 = vdwg.mxu0
    %v701 = vld [vmem:[%s1 + $0x11] sm:$0x1]
    %v702 = vld [vmem:[%s1 + $0x12] sm:$0x1]
    %v703 = vld [vmem:[%s1 + $0x13] sm:$0x1]
    %v704 = vld [vmem:[%s1 + $0x14] sm:$0x1]
    %v705 = vadd.f32 %v46, %v695
    %v706 = vadd.f32 %v47, %v698
    %v707 = vsel %vm84, %v705, 0.0
    %708 = vadd.xlane.f32.xlu0 %v707
    %v709 = vpop.xlane.xlu0 %708
    %v710 = vsel %vm84, %v706, 0.0
    %711 = vadd.xlane.f32.xlu0 %v710
    %v712 = vpop.xlane.xlu0 %711
    %v713 = vrcp.pop 32.0
    %v714 = vmul.f32 %v709, %v713
    %v715 = vmul.f32 %v712, %v713
    %v716 = vsub.f32 %v705, %v714
    %v717 = vsub.f32 %v706, %v715
    %v718 = vmul.f32 %v716, %v716
    %v719 = vmul.f32 %v717, %v717
    %v720 = vsel %vm84, %v718, 0.0
    %721 = vadd.xlane.f32.xlu0 %v720
    %v722 = vpop.xlane.xlu0 %721
    %v723 = vsel %vm84, %v719, 0.0
    %724 = vadd.xlane.f32.xlu0 %v723
    %v725 = vpop.xlane.xlu0 %724
    %v726 = vmul.f32 %v722, %v713
    %v727 = vmul.f32 %v725, %v713
    %v728 = vadd.f32 %v726, 1e-05
    %v729 = vadd.f32 %v727, 1e-05
    %v730 = vrsqrt.pop %v728
    %v731 = vrsqrt.pop %v729
    %v732 = vmul.f32 %v716, %v730
    %v733 = vmul.f32 %v717, %v731
    %v734 = vlaneseq
    %v735 = vshrl.u32 %v734, 7
    %v736 = vsub.s32 0, %v735
    %v737 = vrot.slane %v701, %v736
    %v738 = vmul.f32 %v732, %v737
    %v739 = vmul.f32 %v733, %v737
    %v740 = vlaneseq
    %v741 = vshrl.u32 %v740, 7
    %v742 = vsub.s32 0, %v741
    %v743 = vrot.slane %v702, %v742
    %v744 = vadd.f32 %v738, %v743
    %v745 = vadd.f32 %v739, %v743
    %v746 = vld [vmem:[%s3] sm:$0xf]
    %v747 = vld [vmem:[%s3 + $0x4] sm:$0xf]
    %v748 = vld [vmem:[%s3 + $0x8] sm:$0xf]
    %v749 = vld [vmem:[%s3 + $0xc] sm:$0xf]
    %v750 = vld [vmem:[%s3 + $0x10] sm:$0x1]
    %v751 = vunpack.c.l.bf16 %v750
    %v752 = vld [vmem:[%s4] sm:$0xf]
    %v753 = vld [vmem:[%s4 + $0x4] sm:$0xf]
    %v754 = vld [vmem:[%s4 + $0x8] sm:$0xf]
    %v755 = vld [vmem:[%s4 + $0xc] sm:$0xf]
    %v756 = vld [vmem:[%s4 + $0x10] sm:$0xf]
    %v757 = vld [vmem:[%s4 + $0x14] sm:$0xf]
    %v758 = vld [vmem:[%s4 + $0x18] sm:$0xf]
    %v759 = vld [vmem:[%s4 + $0x1c] sm:$0xf]
    %v760 = vld [vmem:[%s4 + $0x20] sm:$0xf]
    %v761 = vld [vmem:[%s4 + $0x24] sm:$0xf]
    %v762 = vld [vmem:[%s4 + $0x28] sm:$0xf]
    %v763 = vld [vmem:[%s4 + $0x2c] sm:$0xf]
    %v764 = vld [vmem:[%s4 + $0x30] sm:$0xf]
    %v765 = vld [vmem:[%s4 + $0x34] sm:$0xf]
    %v766 = vld [vmem:[%s4 + $0x38] sm:$0xf]
    %v767 = vld [vmem:[%s4 + $0x3c] sm:$0xf]
    %v768 = vld [vmem:[%s4 + $0x40] sm:$0x1]
    %v769 = vunpack.c.l.bf16 %v768
    %v770 = vpack.c.bf16 %v745, %v744
    %v771 = vlaneseq
    %v772 = vshrl.u32 %v771, 7
    %v773 = vsub.s32 0, %v772
    %v774 = vrot.slane %v751, %v773
    %v779 = vunpack.c.l.b16 %v746
    %v780 = vunpack.c.l.b16 %v747
    %v781 = vunpack.c.l.b16 %v748
    %v782 = vunpack.c.l.b16 %v749
    %v783 = vpack.c.b16 %v780, %v779
    %v784 = vpack.c.b16 %v782, %v781
    %v788 = vsel %vm84, %v770, 0
    %790 = vmatprep.subr.bf16.mxu0 0
    %791 = vmatpush1.bf16.msra.mxu0 %v783
    %792 = vmatprep.subr.bf16.mxu0 0
    %793 = vmatpush1.bf16.msra.mxu0 %v784
    %794 = vmatprep.subr.bf16.mxu0 0
    %795 = vmatpush1.bf16.msra.mxu0 0
    %796 = vmatprep.subr.bf16.mxu0 0
    %797 = vmatpush1.bf16.msra.mxu0 0
    %798 = vmatprep.subr.bf16.mxu0 0
    %799 = vmatpush1.bf16.msra.mxu0 0
    %800 = vmatprep.subr.bf16.mxu0 0
    %801 = vmatpush1.bf16.msra.mxu0 0
    %802 = vmatprep.subr.bf16.mxu0 0
    %803 = vmatpush1.bf16.msra.mxu0 0
    %804 = vmatprep.subr.bf16.mxu0 0
    %805 = vmatpush1.bf16.msra.mxu0 0
    %806 = vmatprep.subr.bf16.mxu0 0
    %807 = vmatpush1.bf16.msra.mxu0 0
    %808 = vmatprep.subr.bf16.mxu0 0
    %809 = vmatpush1.bf16.msra.mxu0 0
    %810 = vmatprep.subr.bf16.mxu0 0
    %811 = vmatpush1.bf16.msra.mxu0 0
    %812 = vmatprep.subr.bf16.mxu0 0
    %813 = vmatpush1.bf16.msra.mxu0 0
    %814 = vmatprep.subr.bf16.mxu0 0
    %815 = vmatpush1.bf16.msra.mxu0 0
    %816 = vmatprep.subr.bf16.mxu0 0
    %817 = vmatpush1.bf16.msra.mxu0 0
    %818 = vmatprep.subr.bf16.mxu0 0
    %819 = vmatpush1.bf16.msra.mxu0 0
    %820 = vmatprep.subr.bf16.mxu0 0
    %821 = vmatpush1.bf16.msra.mxu0 0
    %822 = vmatprep.mubr.bf16.mxu0 0
    %823 = vmatmul.mubr.bf16.gmra.mrb[0].mxu0 %v788
    %v824 = vpop.f32.mrb[0].mxu0
    %v825 = vadd.f32 %v774, %v824
    %v826 = vpop.f32.mrb[0].mxu0
    %v827 = vpop.f32.mrb[0].mxu0
    %v828 = vadd.f32 %v774, %v827
    %v829 = vpop.f32.mrb[0].mxu0
    %830 = vdwg.mxu0
    %v831 = vmul.f32 %v825, 0.5
    %v832 = vmul.f32 %v828, 0.5
    %v833 = vmul.f32 %v825, 0.044715
    %v834 = vmul.f32 %v828, 0.044715
    %v835 = vmul.f32 %v833, %v825
    %v836 = vmul.f32 %v834, %v828
    %v837 = vmul.f32 %v835, %v825
    %v838 = vmul.f32 %v836, %v828
    %v839 = vadd.f32 %v825, %v837
    %v840 = vadd.f32 %v828, %v838
    %v841 = vmul.f32 %v839, 0.7978846
    %v842 = vmul.f32 %v840, 0.7978846
    %v843 = vtanh.pop %v841
    %v844 = vtanh.pop %v842
    %v845 = vadd.f32 %v843, 1.0
    %v846 = vadd.f32 %v844, 1.0
    %v847 = vmul.f32 %v831, %v845
    %v848 = vmul.f32 %v832, %v846
    %v849 = vpack.c.bf16 %v848, %v847
    %v850 = vlaneseq
    %v851 = vshrl.u32 %v850, 7
    %v852 = vsub.s32 0, %v851
    %v853 = vrot.slane %v769, %v852
    %v870 = vunpack.c.l.b16 %v752
    %v871 = vunpack.c.l.b16 %v753
    %v872 = vunpack.c.l.b16 %v754
    %v873 = vunpack.c.l.b16 %v755
    %v874 = vunpack.c.l.b16 %v756
    %v875 = vunpack.c.l.b16 %v757
    %v876 = vunpack.c.l.b16 %v758
    %v877 = vunpack.c.l.b16 %v759
    %v878 = vunpack.c.l.b16 %v760
    %v879 = vunpack.c.l.b16 %v761
    %v880 = vunpack.c.l.b16 %v762
    %v881 = vunpack.c.l.b16 %v763
    %v882 = vunpack.c.l.b16 %v764
    %v883 = vunpack.c.l.b16 %v765
    %v884 = vunpack.c.l.b16 %v766
    %v885 = vunpack.c.l.b16 %v767
    %v886 = vpack.c.b16 %v871, %v870
    %v887 = vpack.c.b16 %v873, %v872
    %v888 = vpack.c.b16 %v875, %v874
    %v889 = vpack.c.b16 %v877, %v876
    %v890 = vpack.c.b16 %v879, %v878
    %v891 = vpack.c.b16 %v881, %v880
    %v892 = vpack.c.b16 %v883, %v882
    %v893 = vpack.c.b16 %v885, %v884
    %902 = vmatprep.subr.bf16.mxu0 0
    %903 = vmatpush1.bf16.msra.mxu0 %v886
    %904 = vmatprep.subr.bf16.mxu0 0
    %905 = vmatpush1.bf16.msra.mxu0 %v887
    %906 = vmatprep.subr.bf16.mxu0 0
    %907 = vmatpush1.bf16.msra.mxu0 %v888
    %908 = vmatprep.subr.bf16.mxu0 0
    %909 = vmatpush1.bf16.msra.mxu0 %v889
    %910 = vmatprep.subr.bf16.mxu0 0
    %911 = vmatpush1.bf16.msra.mxu0 %v890
    %912 = vmatprep.subr.bf16.mxu0 0
    %913 = vmatpush1.bf16.msra.mxu0 %v891
    %914 = vmatprep.subr.bf16.mxu0 0
    %915 = vmatpush1.bf16.msra.mxu0 %v892
    %916 = vmatprep.subr.bf16.mxu0 0
    %917 = vmatpush1.bf16.msra.mxu0 %v893
    %918 = vmatprep.subr.bf16.mxu0 0
    %919 = vmatpush1.bf16.msra.mxu0 0
    %920 = vmatprep.subr.bf16.mxu0 0
    %921 = vmatpush1.bf16.msra.mxu0 0
    %922 = vmatprep.subr.bf16.mxu0 0
    %923 = vmatpush1.bf16.msra.mxu0 0
    %924 = vmatprep.subr.bf16.mxu0 0
    %925 = vmatpush1.bf16.msra.mxu0 0
    %926 = vmatprep.subr.bf16.mxu0 0
    %927 = vmatpush1.bf16.msra.mxu0 0
    %928 = vmatprep.subr.bf16.mxu0 0
    %929 = vmatpush1.bf16.msra.mxu0 0
    %930 = vmatprep.subr.bf16.mxu0 0
    %931 = vmatpush1.bf16.msra.mxu0 0
    %932 = vmatprep.subr.bf16.mxu0 0
    %933 = vmatpush1.bf16.msra.mxu0 0
    %934 = vmatprep.mubr.bf16.mxu0 0
    %935 = vmatmul.mubr.bf16.gmra.mrb[0].mxu0 %v849
    %v936 = vpop.f32.mrb[0].mxu0
    %v937 = vadd.f32 %v853, %v936
    %v938 = vpop.f32.mrb[0].mxu0
    %v939 = vpop.f32.mrb[0].mxu0
    %v940 = vadd.f32 %v853, %v939
    %v941 = vpop.f32.mrb[0].mxu0
    %942 = vdwg.mxu0
    %v943 = vadd.f32 %v744, %v937
    %v944 = vadd.f32 %v745, %v940
    %v945 = vsel %vm84, %v943, 0.0
    %946 = vadd.xlane.f32.xlu0 %v945
    %v947 = vpop.xlane.xlu0 %946
    %v948 = vsel %vm84, %v944, 0.0
    %949 = vadd.xlane.f32.xlu0 %v948
    %v950 = vpop.xlane.xlu0 %949
    %v951 = vmul.f32 %v947, %v713
    %v952 = vmul.f32 %v950, %v713
    %v953 = vsub.f32 %v943, %v951
    %v954 = vsub.f32 %v944, %v952
    %v955 = vmul.f32 %v953, %v953
    %v956 = vmul.f32 %v954, %v954
    %v957 = vsel %vm84, %v955, 0.0
    %958 = vadd.xlane.f32.xlu0 %v957
    %v959 = vpop.xlane.xlu0 %958
    %v960 = vsel %vm84, %v956, 0.0
    %961 = vadd.xlane.f32.xlu0 %v960
    %v962 = vpop.xlane.xlu0 %961
    %v963 = vmul.f32 %v959, %v713
    %v964 = vmul.f32 %v962, %v713
    %v965 = vadd.f32 %v963, 1e-05
    %v966 = vadd.f32 %v964, 1e-05
    %v967 = vrsqrt.pop %v965
    %v968 = vrsqrt.pop %v966
    %v969 = vmul.f32 %v953, %v967
    %v970 = vmul.f32 %v954, %v968
    %v971 = vlaneseq
    %v972 = vshrl.u32 %v971, 7
    %v973 = vsub.s32 0, %v972
    %v974 = vrot.slane %v703, %v973
    %v975 = vmul.f32 %v969, %v974
    %v976 = vmul.f32 %v970, %v974
    %v977 = vlaneseq
    %v978 = vshrl.u32 %v977, 7
    %v979 = vsub.s32 0, %v978
    %v980 = vrot.slane %v704, %v979
    %v981 = vadd.f32 %v975, %v980
    %v982 = vadd.f32 %v976, %v980
    %s983 = scalar_lea.vmem %s2, 20
    %v984 = vld [vmem:[%s983] sm:$0xf]
    %v985 = vld [vmem:[%s983 + $0x4] sm:$0xf]
    %v986 = vld [vmem:[%s983 + $0x8] sm:$0xf]
    %v987 = vld [vmem:[%s983 + $0xc] sm:$0xf]
    %v988 = vld [vmem:[%s983 + $0x10] sm:$0x1]
    %v989 = vunpack.c.l.bf16 %v988
    %v990 = vpack.c.bf16 %v982, %v981
    %v991 = vlaneseq
    %v992 = vshrl.u32 %v991, 7
    %v993 = vsub.s32 0, %v992
    %v994 = vrot.slane %v989, %v993
    %v999 = vunpack.c.l.b16 %v984
    %v1000 = vunpack.c.l.b16 %v985
    %v1001 = vunpack.c.l.b16 %v986
    %v1002 = vunpack.c.l.b16 %v987
    %v1003 = vpack.c.b16 %v1000, %v999
    %v1004 = vpack.c.b16 %v1002, %v1001
    %v1008 = vsel %vm84, %v990, 0
    %1010 = vmatprep.subr.bf16.mxu0 0
    %1011 = vmatpush1.bf16.msra.mxu0 %v1003
    %1012 = vmatprep.subr.bf16.mxu0 0
    %1013 = vmatpush1.bf16.msra.mxu0 %v1004
    %1014 = vmatprep.subr.bf16.mxu0 0
    %1015 = vmatpush1.bf16.msra.mxu0 0
    %1016 = vmatprep.subr.bf16.mxu0 0
    %1017 = vmatpush1.bf16.msra.mxu0 0
    %1018 = vmatprep.subr.bf16.mxu0 0
    %1019 = vmatpush1.bf16.msra.mxu0 0
    %1020 = vmatprep.subr.bf16.mxu0 0
    %1021 = vmatpush1.bf16.msra.mxu0 0
    %1022 = vmatprep.subr.bf16.mxu0 0
    %1023 = vmatpush1.bf16.msra.mxu0 0
    %1024 = vmatprep.subr.bf16.mxu0 0
    %1025 = vmatpush1.bf16.msra.mxu0 0
    %1026 = vmatprep.subr.bf16.mxu0 0
    %1027 = vmatpush1.bf16.msra.mxu0 0
    %1028 = vmatprep.subr.bf16.mxu0 0
    %1029 = vmatpush1.bf16.msra.mxu0 0
    %1030 = vmatprep.subr.bf16.mxu0 0
    %1031 = vmatpush1.bf16.msra.mxu0 0
    %1032 = vmatprep.subr.bf16.mxu0 0
    %1033 = vmatpush1.bf16.msra.mxu0 0
    %1034 = vmatprep.subr.bf16.mxu0 0
    %1035 = vmatpush1.bf16.msra.mxu0 0
    %1036 = vmatprep.subr.bf16.mxu0 0
    %1037 = vmatpush1.bf16.msra.mxu0 0
    %1038 = vmatprep.subr.bf16.mxu0 0
    %1039 = vmatpush1.bf16.msra.mxu0 0
    %1040 = vmatprep.subr.bf16.mxu0 0
    %1041 = vmatpush1.bf16.msra.mxu0 0
    %1042 = vmatprep.mubr.bf16.mxu0 0
    %1043 = vmatmul.mubr.bf16.gmra.mrb[0].mxu0 %v1008
    %v1044 = vpop.f32.mrb[0].mxu0
    %v1045 = vadd.f32 %v994, %v1044
    %v1046 = vpop.f32.mrb[0].mxu0
    %v1047 = vpop.f32.mrb[0].mxu0
    %v1048 = vadd.f32 %v994, %v1047
    %v1049 = vpop.f32.mrb[0].mxu0
    %1050 = vdwg.mxu0
    %v1051 = vpack.c.bf16 %v1048, %v1045
    %1053 = vrot.lane.b32.xlu0 %v1051, 96
    %v1054 = vpop.permute.xlu0 %1053
    %v1056 = vsel %vm133, %v1051, 0
    %v1059 = vsel %vm133, %v1054, 0
    %1061 = vmatprep.subr.bf16.mxu0 0
    %1062 = vmatpush1.bf16.xpose.msra.mxu0 %v1059
    %1063 = vmatprep.subr.bf16.mxu0 0
    %1064 = vmatpush1.bf16.xpose.msra.mxu0 0
    %1065 = vmatprep.subr.bf16.mxu0 0
    %1066 = vmatpush1.bf16.xpose.msra.mxu0 0
    %1067 = vmatprep.subr.bf16.mxu0 0
    %1068 = vmatpush1.bf16.xpose.msra.mxu0 0
    %1069 = vmatprep.subr.bf16.mxu0 0
    %1070 = vmatpush1.bf16.xpose.msra.mxu0 0
    %1071 = vmatprep.subr.bf16.mxu0 0
    %1072 = vmatpush1.bf16.xpose.msra.mxu0 0
    %1073 = vmatprep.subr.bf16.mxu0 0
    %1074 = vmatpush1.bf16.xpose.msra.mxu0 0
    %1075 = vmatprep.subr.bf16.mxu0 0
    %1076 = vmatpush1.bf16.xpose.msra.mxu0 0
    %1077 = vmatprep.subr.bf16.mxu0 0
    %1078 = vmatpush1.bf16.xpose.msra.mxu0 0
    %1079 = vmatprep.subr.bf16.mxu0 0
    %1080 = vmatpush1.bf16.xpose.msra.mxu0 0
    %1081 = vmatprep.subr.bf16.mxu0 0
    %1082 = vmatpush1.bf16.xpose.msra.mxu0 0
    %1083 = vmatprep.subr.bf16.mxu0 0
    %1084 = vmatpush1.bf16.xpose.msra.mxu0 0
    %1085 = vmatprep.subr.bf16.mxu0 0
    %1086 = vmatpush1.bf16.xpose.msra.mxu0 0
    %1087 = vmatprep.subr.bf16.mxu0 0
    %1088 = vmatpush1.bf16.xpose.msra.mxu0 0
    %1089 = vmatprep.subr.bf16.mxu0 0
    %1090 = vmatpush1.bf16.xpose.msra.mxu0 0
    %1091 = vmatprep.subr.bf16.mxu0 0
    %1092 = vmatpush1.bf16.xpose.msra.mxu0 0
    %1093 = vmatprep.mubr.bf16.mxu0 0
    %1094 = vmatmul.mubr.bf16.gmra.mrb[0].mxu0 %v1056
    %v1095 = vpop.f32.mrb[0].mxu0
    %v1096 = vadd.f32 %v59, %v1095
    %v1097 = vpop.f32.mrb[0].mxu0
    %v1098 = vpop.f32.mrb[0].mxu0
    %v1099 = vadd.f32 %v60, %v1098
    %v1100 = vpop.f32.mrb[0].mxu0
    %1101 = vdwg.mxu0
    %v1102 = vsel %vm181, %v1096, -inf
    %1103 = vmax.xlane.f32.xlu0 %v1102
    %v1104 = vpop.xlane.xlu0 %1103
    %v1105 = vsel %vm181, %v1099, -inf
    %1106 = vmax.xlane.f32.xlu0 %v1105
    %v1107 = vpop.xlane.xlu0 %1106
    %v1108 = vsub.f32 %v1096, %v1104
    %v1109 = vsub.f32 %v1099, %v1107
    %v1110 = vmul.f32 %v1108, 1.442695
    %v1111 = vpow.pop %v1110
    %v1112 = vmul.f32 %v1109, 1.442695
    %v1113 = vpow.pop %v1112
    %v1114 = vsel %vm181, %v1111, 0.0
    %1115 = vadd.xlane.f32.xlu0 %v1114
    %v1116 = vpop.xlane.xlu0 %1115
    %v1117 = vsel %vm181, %v1113, 0.0
    %1118 = vadd.xlane.f32.xlu0 %v1117
    %v1119 = vpop.xlane.xlu0 %1118
    %v1120 = vpack.c.bf16 %v1113, %v1111
    %1121 = vrot.lane.b32.xlu0 %v1051, 64
    %v1122 = vpop.permute.xlu0 %1121
    %v1125 = vsel %vm181, %v1120, 0
    %1127 = vmatprep.subr.bf16.mxu0 0
    %1128 = vmatpush1.bf16.msra.mxu0 %v1122
    %1129 = vmatprep.subr.bf16.mxu0 0
    %1130 = vmatpush1.bf16.msra.mxu0 0
    %1131 = vmatprep.subr.bf16.mxu0 0
    %1132 = vmatpush1.bf16.msra.mxu0 0
    %1133 = vmatprep.subr.bf16.mxu0 0
    %1134 = vmatpush1.bf16.msra.mxu0 0
    %1135 = vmatprep.subr.bf16.mxu0 0
    %1136 = vmatpush1.bf16.msra.mxu0 0
    %1137 = vmatprep.subr.bf16.mxu0 0
    %1138 = vmatpush1.bf16.msra.mxu0 0
    %1139 = vmatprep.subr.bf16.mxu0 0
    %1140 = vmatpush1.bf16.msra.mxu0 0
    %1141 = vmatprep.subr.bf16.mxu0 0
    %1142 = vmatpush1.bf16.msra.mxu0 0
    %1143 = vmatprep.subr.bf16.mxu0 0
    %1144 = vmatpush1.bf16.msra.mxu0 0
    %1145 = vmatprep.subr.bf16.mxu0 0
    %1146 = vmatpush1.bf16.msra.mxu0 0
    %1147 = vmatprep.subr.bf16.mxu0 0
    %1148 = vmatpush1.bf16.msra.mxu0 0
    %1149 = vmatprep.subr.bf16.mxu0 0
    %1150 = vmatpush1.bf16.msra.mxu0 0
    %1151 = vmatprep.subr.bf16.mxu0 0
    %1152 = vmatpush1.bf16.msra.mxu0 0
    %1153 = vmatprep.subr.bf16.mxu0 0
    %1154 = vmatpush1.bf16.msra.mxu0 0
    %1155 = vmatprep.subr.bf16.mxu0 0
    %1156 = vmatpush1.bf16.msra.mxu0 0
    %1157 = vmatprep.subr.bf16.mxu0 0
    %1158 = vmatpush1.bf16.msra.mxu0 0
    %1159 = vmatprep.mubr.bf16.mxu0 0
    %1160 = vmatmul.mubr.bf16.gmra.mrb[0].mxu0 %v1125
    %v1161 = vpop.f32.mrb[0].mxu0
    %v1162 = vadd.f32 0.0, %v1161
    %v1163 = vpop.f32.mrb[0].mxu0
    %v1164 = vpop.f32.mrb[0].mxu0
    %v1165 = vadd.f32 0.0, %v1164
    %v1166 = vpop.f32.mrb[0].mxu0
    %1167 = vdwg.mxu0
    %v1168 = vrcp.pop %v1116
    %v1169 = vrcp.pop %v1119
    %v1170 = vmul.f32 %v1162, %v1168
    %v1171 = vmul.f32 %v1165, %v1169
    %1172 = vrot.lane.b32.xlu0 %v1051, 120
    %v1173 = vpop.permute.xlu0 %1172
    %1174 = vrot.lane.b32.xlu0 %v1051, 88
    %v1175 = vpop.permute.xlu0 %1174
    %v1177 = vsel %vm133, %v1173, 0
    %v1180 = vsel %vm133, %v1175, 0
    %1182 = vmatprep.subr.bf16.mxu0 0
    %1183 = vmatpush1.bf16.xpose.msra.mxu0 %v1180
    %1184 = vmatprep.subr.bf16.mxu0 0
    %1185 = vmatpush1.bf16.xpose.msra.mxu0 0
    %1186 = vmatprep.subr.bf16.mxu0 0
    %1187 = vmatpush1.bf16.xpose.msra.mxu0 0
    %1188 = vmatprep.subr.bf16.mxu0 0
    %1189 = vmatpush1.bf16.xpose.msra.mxu0 0
    %1190 = vmatprep.subr.bf16.mxu0 0
    %1191 = vmatpush1.bf16.xpose.msra.mxu0 0
    %1192 = vmatprep.subr.bf16.mxu0 0
    %1193 = vmatpush1.bf16.xpose.msra.mxu0 0
    %1194 = vmatprep.subr.bf16.mxu0 0
    %1195 = vmatpush1.bf16.xpose.msra.mxu0 0
    %1196 = vmatprep.subr.bf16.mxu0 0
    %1197 = vmatpush1.bf16.xpose.msra.mxu0 0
    %1198 = vmatprep.subr.bf16.mxu0 0
    %1199 = vmatpush1.bf16.xpose.msra.mxu0 0
    %1200 = vmatprep.subr.bf16.mxu0 0
    %1201 = vmatpush1.bf16.xpose.msra.mxu0 0
    %1202 = vmatprep.subr.bf16.mxu0 0
    %1203 = vmatpush1.bf16.xpose.msra.mxu0 0
    %1204 = vmatprep.subr.bf16.mxu0 0
    %1205 = vmatpush1.bf16.xpose.msra.mxu0 0
    %1206 = vmatprep.subr.bf16.mxu0 0
    %1207 = vmatpush1.bf16.xpose.msra.mxu0 0
    %1208 = vmatprep.subr.bf16.mxu0 0
    %1209 = vmatpush1.bf16.xpose.msra.mxu0 0
    %1210 = vmatprep.subr.bf16.mxu0 0
    %1211 = vmatpush1.bf16.xpose.msra.mxu0 0
    %1212 = vmatprep.subr.bf16.mxu0 0
    %1213 = vmatpush1.bf16.xpose.msra.mxu0 0
    %1214 = vmatprep.mubr.bf16.mxu0 0
    %1215 = vmatmul.mubr.bf16.gmra.mrb[0].mxu0 %v1177
    %v1216 = vpop.f32.mrb[0].mxu0
    %v1217 = vadd.f32 %v59, %v1216
    %v1218 = vpop.f32.mrb[0].mxu0
    %v1219 = vpop.f32.mrb[0].mxu0
    %v1220 = vadd.f32 %v60, %v1219
    %v1221 = vpop.f32.mrb[0].mxu0
    %1222 = vdwg.mxu0
    %v1223 = vsel %vm181, %v1217, -inf
    %1224 = vmax.xlane.f32.xlu0 %v1223
    %v1225 = vpop.xlane.xlu0 %1224
    %v1226 = vsel %vm181, %v1220, -inf
    %1227 = vmax.xlane.f32.xlu0 %v1226
    %v1228 = vpop.xlane.xlu0 %1227
    %v1229 = vsub.f32 %v1217, %v1225
    %v1230 = vsub.f32 %v1220, %v1228
    %v1231 = vmul.f32 %v1229, 1.442695
    %v1232 = vpow.pop %v1231
    %v1233 = vmul.f32 %v1230, 1.442695
    %v1234 = vpow.pop %v1233
    %v1235 = vsel %vm181, %v1232, 0.0
    %1236 = vadd.xlane.f32.xlu0 %v1235
    %v1237 = vpop.xlane.xlu0 %1236
    %v1238 = vsel %vm181, %v1234, 0.0
    %1239 = vadd.xlane.f32.xlu0 %v1238
    %v1240 = vpop.xlane.xlu0 %1239
    %v1241 = vpack.c.bf16 %v1234, %v1232
    %1242 = vrot.lane.b32.xlu0 %v1051, 56
    %v1243 = vpop.permute.xlu0 %1242
    %v1246 = vsel %vm181, %v1241, 0
    %1248 = vmatprep.subr.bf16.mxu0 0
    %1249 = vmatpush1.bf16.msra.mxu0 %v1243
    %1250 = vmatprep.subr.bf16.mxu0 0
    %1251 = vmatpush1.bf16.msra.mxu0 0
    %1252 = vmatprep.subr.bf16.mxu0 0
    %1253 = vmatpush1.bf16.msra.mxu0 0
    %1254 = vmatprep.subr.bf16.mxu0 0
    %1255 = vmatpush1.bf16.msra.mxu0 0
    %1256 = vmatprep.subr.bf16.mxu0 0
    %1257 = vmatpush1.bf16.msra.mxu0 0
    %1258 = vmatprep.subr.bf16.mxu0 0
    %1259 = vmatpush1.bf16.msra.mxu0 0
    %1260 = vmatprep.subr.bf16.mxu0 0
    %1261 = vmatpush1.bf16.msra.mxu0 0
    %1262 = vmatprep.subr.bf16.mxu0 0
    %1263 = vmatpush1.bf16.msra.mxu0 0
    %1264 = vmatprep.subr.bf16.mxu0 0
    %1265 = vmatpush1.bf16.msra.mxu0 0
    %1266 = vmatprep.subr.bf16.mxu0 0
    %1267 = vmatpush1.bf16.msra.mxu0 0
    %1268 = vmatprep.subr.bf16.mxu0 0
    %1269 = vmatpush1.bf16.msra.mxu0 0
    %1270 = vmatprep.subr.bf16.mxu0 0
    %1271 = vmatpush1.bf16.msra.mxu0 0
    %1272 = vmatprep.subr.bf16.mxu0 0
    %1273 = vmatpush1.bf16.msra.mxu0 0
    %1274 = vmatprep.subr.bf16.mxu0 0
    %1275 = vmatpush1.bf16.msra.mxu0 0
    %1276 = vmatprep.subr.bf16.mxu0 0
    %1277 = vmatpush1.bf16.msra.mxu0 0
    %1278 = vmatprep.subr.bf16.mxu0 0
    %1279 = vmatpush1.bf16.msra.mxu0 0
    %1280 = vmatprep.mubr.bf16.mxu0 0
    %1281 = vmatmul.mubr.bf16.gmra.mrb[0].mxu0 %v1246
    %v1282 = vpop.f32.mrb[0].mxu0
    %v1283 = vadd.f32 0.0, %v1282
    %v1284 = vpop.f32.mrb[0].mxu0
    %v1285 = vpop.f32.mrb[0].mxu0
    %v1286 = vadd.f32 0.0, %v1285
    %v1287 = vpop.f32.mrb[0].mxu0
    %1288 = vdwg.mxu0
    %v1289 = vrcp.pop %v1237
    %v1290 = vrcp.pop %v1240
    %v1291 = vmul.f32 %v1283, %v1289
    %v1292 = vmul.f32 %v1286, %v1290
    %1293 = vrot.lane.b32.xlu0 %v1051, 112
    %v1294 = vpop.permute.xlu0 %1293
    %1295 = vrot.lane.b32.xlu0 %v1051, 80
    %v1296 = vpop.permute.xlu0 %1295
    %v1298 = vsel %vm133, %v1294, 0
    %v1301 = vsel %vm133, %v1296, 0
    %1303 = vmatprep.subr.bf16.mxu0 0
    %1304 = vmatpush1.bf16.xpose.msra.mxu0 %v1301
    %1305 = vmatprep.subr.bf16.mxu0 0
    %1306 = vmatpush1.bf16.xpose.msra.mxu0 0
    %1307 = vmatprep.subr.bf16.mxu0 0
    %1308 = vmatpush1.bf16.xpose.msra.mxu0 0
    %1309 = vmatprep.subr.bf16.mxu0 0
    %1310 = vmatpush1.bf16.xpose.msra.mxu0 0
    %1311 = vmatprep.subr.bf16.mxu0 0
    %1312 = vmatpush1.bf16.xpose.msra.mxu0 0
    %1313 = vmatprep.subr.bf16.mxu0 0
    %1314 = vmatpush1.bf16.xpose.msra.mxu0 0
    %1315 = vmatprep.subr.bf16.mxu0 0
    %1316 = vmatpush1.bf16.xpose.msra.mxu0 0
    %1317 = vmatprep.subr.bf16.mxu0 0
    %1318 = vmatpush1.bf16.xpose.msra.mxu0 0
    %1319 = vmatprep.subr.bf16.mxu0 0
    %1320 = vmatpush1.bf16.xpose.msra.mxu0 0
    %1321 = vmatprep.subr.bf16.mxu0 0
    %1322 = vmatpush1.bf16.xpose.msra.mxu0 0
    %1323 = vmatprep.subr.bf16.mxu0 0
    %1324 = vmatpush1.bf16.xpose.msra.mxu0 0
    %1325 = vmatprep.subr.bf16.mxu0 0
    %1326 = vmatpush1.bf16.xpose.msra.mxu0 0
    %1327 = vmatprep.subr.bf16.mxu0 0
    %1328 = vmatpush1.bf16.xpose.msra.mxu0 0
    %1329 = vmatprep.subr.bf16.mxu0 0
    %1330 = vmatpush1.bf16.xpose.msra.mxu0 0
    %1331 = vmatprep.subr.bf16.mxu0 0
    %1332 = vmatpush1.bf16.xpose.msra.mxu0 0
    %1333 = vmatprep.subr.bf16.mxu0 0
    %1334 = vmatpush1.bf16.xpose.msra.mxu0 0
    %1335 = vmatprep.mubr.bf16.mxu0 0
    %1336 = vmatmul.mubr.bf16.gmra.mrb[0].mxu0 %v1298
    %v1337 = vpop.f32.mrb[0].mxu0
    %v1338 = vadd.f32 %v59, %v1337
    %v1339 = vpop.f32.mrb[0].mxu0
    %v1340 = vpop.f32.mrb[0].mxu0
    %v1341 = vadd.f32 %v60, %v1340
    %v1342 = vpop.f32.mrb[0].mxu0
    %1343 = vdwg.mxu0
    %v1344 = vsel %vm181, %v1338, -inf
    %1345 = vmax.xlane.f32.xlu0 %v1344
    %v1346 = vpop.xlane.xlu0 %1345
    %v1347 = vsel %vm181, %v1341, -inf
    %1348 = vmax.xlane.f32.xlu0 %v1347
    %v1349 = vpop.xlane.xlu0 %1348
    %v1350 = vsub.f32 %v1338, %v1346
    %v1351 = vsub.f32 %v1341, %v1349
    %v1352 = vmul.f32 %v1350, 1.442695
    %v1353 = vpow.pop %v1352
    %v1354 = vmul.f32 %v1351, 1.442695
    %v1355 = vpow.pop %v1354
    %v1356 = vsel %vm181, %v1353, 0.0
    %1357 = vadd.xlane.f32.xlu0 %v1356
    %v1358 = vpop.xlane.xlu0 %1357
    %v1359 = vsel %vm181, %v1355, 0.0
    %1360 = vadd.xlane.f32.xlu0 %v1359
    %v1361 = vpop.xlane.xlu0 %1360
    %v1362 = vpack.c.bf16 %v1355, %v1353
    %1363 = vrot.lane.b32.xlu0 %v1051, 48
    %v1364 = vpop.permute.xlu0 %1363
    %v1367 = vsel %vm181, %v1362, 0
    %1369 = vmatprep.subr.bf16.mxu0 0
    %1370 = vmatpush1.bf16.msra.mxu0 %v1364
    %1371 = vmatprep.subr.bf16.mxu0 0
    %1372 = vmatpush1.bf16.msra.mxu0 0
    %1373 = vmatprep.subr.bf16.mxu0 0
    %1374 = vmatpush1.bf16.msra.mxu0 0
    %1375 = vmatprep.subr.bf16.mxu0 0
    %1376 = vmatpush1.bf16.msra.mxu0 0
    %1377 = vmatprep.subr.bf16.mxu0 0
    %1378 = vmatpush1.bf16.msra.mxu0 0
    %1379 = vmatprep.subr.bf16.mxu0 0
    %1380 = vmatpush1.bf16.msra.mxu0 0
    %1381 = vmatprep.subr.bf16.mxu0 0
    %1382 = vmatpush1.bf16.msra.mxu0 0
    %1383 = vmatprep.subr.bf16.mxu0 0
    %1384 = vmatpush1.bf16.msra.mxu0 0
    %1385 = vmatprep.subr.bf16.mxu0 0
    %1386 = vmatpush1.bf16.msra.mxu0 0
    %1387 = vmatprep.subr.bf16.mxu0 0
    %1388 = vmatpush1.bf16.msra.mxu0 0
    %1389 = vmatprep.subr.bf16.mxu0 0
    %1390 = vmatpush1.bf16.msra.mxu0 0
    %1391 = vmatprep.subr.bf16.mxu0 0
    %1392 = vmatpush1.bf16.msra.mxu0 0
    %1393 = vmatprep.subr.bf16.mxu0 0
    %1394 = vmatpush1.bf16.msra.mxu0 0
    %1395 = vmatprep.subr.bf16.mxu0 0
    %1396 = vmatpush1.bf16.msra.mxu0 0
    %1397 = vmatprep.subr.bf16.mxu0 0
    %1398 = vmatpush1.bf16.msra.mxu0 0
    %1399 = vmatprep.subr.bf16.mxu0 0
    %1400 = vmatpush1.bf16.msra.mxu0 0
    %1401 = vmatprep.mubr.bf16.mxu0 0
    %1402 = vmatmul.mubr.bf16.gmra.mrb[0].mxu0 %v1367
    %v1403 = vpop.f32.mrb[0].mxu0
    %v1404 = vadd.f32 0.0, %v1403
    %v1405 = vpop.f32.mrb[0].mxu0
    %v1406 = vpop.f32.mrb[0].mxu0
    %v1407 = vadd.f32 0.0, %v1406
    %v1408 = vpop.f32.mrb[0].mxu0
    %1409 = vdwg.mxu0
    %v1410 = vrcp.pop %v1358
    %v1411 = vrcp.pop %v1361
    %v1412 = vmul.f32 %v1404, %v1410
    %v1413 = vmul.f32 %v1407, %v1411
    %1414 = vrot.lane.b32.xlu0 %v1051, 104
    %v1415 = vpop.permute.xlu0 %1414
    %1416 = vrot.lane.b32.xlu0 %v1051, 72
    %v1417 = vpop.permute.xlu0 %1416
    %v1419 = vsel %vm133, %v1415, 0
    %v1422 = vsel %vm133, %v1417, 0
    %1424 = vmatprep.subr.bf16.mxu0 0
    %1425 = vmatpush1.bf16.xpose.msra.mxu0 %v1422
    %1426 = vmatprep.subr.bf16.mxu0 0
    %1427 = vmatpush1.bf16.xpose.msra.mxu0 0
    %1428 = vmatprep.subr.bf16.mxu0 0
    %1429 = vmatpush1.bf16.xpose.msra.mxu0 0
    %1430 = vmatprep.subr.bf16.mxu0 0
    %1431 = vmatpush1.bf16.xpose.msra.mxu0 0
    %1432 = vmatprep.subr.bf16.mxu0 0
    %1433 = vmatpush1.bf16.xpose.msra.mxu0 0
    %1434 = vmatprep.subr.bf16.mxu0 0
    %1435 = vmatpush1.bf16.xpose.msra.mxu0 0
    %1436 = vmatprep.subr.bf16.mxu0 0
    %1437 = vmatpush1.bf16.xpose.msra.mxu0 0
    %1438 = vmatprep.subr.bf16.mxu0 0
    %1439 = vmatpush1.bf16.xpose.msra.mxu0 0
    %1440 = vmatprep.subr.bf16.mxu0 0
    %1441 = vmatpush1.bf16.xpose.msra.mxu0 0
    %1442 = vmatprep.subr.bf16.mxu0 0
    %1443 = vmatpush1.bf16.xpose.msra.mxu0 0
    %1444 = vmatprep.subr.bf16.mxu0 0
    %1445 = vmatpush1.bf16.xpose.msra.mxu0 0
    %1446 = vmatprep.subr.bf16.mxu0 0
    %1447 = vmatpush1.bf16.xpose.msra.mxu0 0
    %1448 = vmatprep.subr.bf16.mxu0 0
    %1449 = vmatpush1.bf16.xpose.msra.mxu0 0
    %1450 = vmatprep.subr.bf16.mxu0 0
    %1451 = vmatpush1.bf16.xpose.msra.mxu0 0
    %1452 = vmatprep.subr.bf16.mxu0 0
    %1453 = vmatpush1.bf16.xpose.msra.mxu0 0
    %1454 = vmatprep.subr.bf16.mxu0 0
    %1455 = vmatpush1.bf16.xpose.msra.mxu0 0
    %1456 = vmatprep.mubr.bf16.mxu0 0
    %1457 = vmatmul.mubr.bf16.gmra.mrb[0].mxu0 %v1419
    %v1458 = vpop.f32.mrb[0].mxu0
    %v1459 = vadd.f32 %v59, %v1458
    %v1460 = vpop.f32.mrb[0].mxu0
    %v1461 = vpop.f32.mrb[0].mxu0
    %v1462 = vadd.f32 %v60, %v1461
    %v1463 = vpop.f32.mrb[0].mxu0
    %1464 = vdwg.mxu0
    %v1465 = vsel %vm181, %v1459, -inf
    %1466 = vmax.xlane.f32.xlu0 %v1465
    %v1467 = vpop.xlane.xlu0 %1466
    %v1468 = vsel %vm181, %v1462, -inf
    %1469 = vmax.xlane.f32.xlu0 %v1468
    %v1470 = vpop.xlane.xlu0 %1469
    %v1471 = vsub.f32 %v1459, %v1467
    %v1472 = vsub.f32 %v1462, %v1470
    %v1473 = vmul.f32 %v1471, 1.442695
    %v1474 = vpow.pop %v1473
    %v1475 = vmul.f32 %v1472, 1.442695
    %v1476 = vpow.pop %v1475
    %v1477 = vsel %vm181, %v1474, 0.0
    %1478 = vadd.xlane.f32.xlu0 %v1477
    %v1479 = vpop.xlane.xlu0 %1478
    %v1480 = vsel %vm181, %v1476, 0.0
    %1481 = vadd.xlane.f32.xlu0 %v1480
    %v1482 = vpop.xlane.xlu0 %1481
    %v1483 = vpack.c.bf16 %v1476, %v1474
    %1484 = vrot.lane.b32.xlu0 %v1051, 40
    %v1485 = vpop.permute.xlu0 %1484
    %v1488 = vsel %vm181, %v1483, 0
    %1490 = vmatprep.subr.bf16.mxu0 0
    %1491 = vmatpush1.bf16.msra.mxu0 %v1485
    %1492 = vmatprep.subr.bf16.mxu0 0
    %1493 = vmatpush1.bf16.msra.mxu0 0
    %1494 = vmatprep.subr.bf16.mxu0 0
    %1495 = vmatpush1.bf16.msra.mxu0 0
    %1496 = vmatprep.subr.bf16.mxu0 0
    %1497 = vmatpush1.bf16.msra.mxu0 0
    %1498 = vmatprep.subr.bf16.mxu0 0
    %1499 = vmatpush1.bf16.msra.mxu0 0
    %1500 = vmatprep.subr.bf16.mxu0 0
    %1501 = vmatpush1.bf16.msra.mxu0 0
    %1502 = vmatprep.subr.bf16.mxu0 0
    %1503 = vmatpush1.bf16.msra.mxu0 0
    %1504 = vmatprep.subr.bf16.mxu0 0
    %1505 = vmatpush1.bf16.msra.mxu0 0
    %1506 = vmatprep.subr.bf16.mxu0 0
    %1507 = vmatpush1.bf16.msra.mxu0 0
    %1508 = vmatprep.subr.bf16.mxu0 0
    %1509 = vmatpush1.bf16.msra.mxu0 0
    %1510 = vmatprep.subr.bf16.mxu0 0
    %1511 = vmatpush1.bf16.msra.mxu0 0
    %1512 = vmatprep.subr.bf16.mxu0 0
    %1513 = vmatpush1.bf16.msra.mxu0 0
    %1514 = vmatprep.subr.bf16.mxu0 0
    %1515 = vmatpush1.bf16.msra.mxu0 0
    %1516 = vmatprep.subr.bf16.mxu0 0
    %1517 = vmatpush1.bf16.msra.mxu0 0
    %1518 = vmatprep.subr.bf16.mxu0 0
    %1519 = vmatpush1.bf16.msra.mxu0 0
    %1520 = vmatprep.subr.bf16.mxu0 0
    %1521 = vmatpush1.bf16.msra.mxu0 0
    %1522 = vmatprep.mubr.bf16.mxu0 0
    %1523 = vmatmul.mubr.bf16.gmra.mrb[0].mxu0 %v1488
    %v1524 = vpop.f32.mrb[0].mxu0
    %v1525 = vadd.f32 0.0, %v1524
    %v1526 = vpop.f32.mrb[0].mxu0
    %v1527 = vpop.f32.mrb[0].mxu0
    %v1528 = vadd.f32 0.0, %v1527
    %v1529 = vpop.f32.mrb[0].mxu0
    %1530 = vdwg.mxu0
    %v1531 = vrcp.pop %v1479
    %v1532 = vrcp.pop %v1482
    %v1533 = vmul.f32 %v1525, %v1531
    %v1534 = vmul.f32 %v1528, %v1532
    %1537 = vrot.lane.b32.xlu0 %v1291, 8
    %v1538 = vpop.permute.xlu0 %1537
    %1539 = vrot.lane.b32.xlu0 %v1292, 8
    %v1540 = vpop.permute.xlu0 %1539
    %1545 = vrot.lane.b32.xlu0 %v1412, 16
    %v1546 = vpop.permute.xlu0 %1545
    %1547 = vrot.lane.b32.xlu0 %v1413, 16
    %v1548 = vpop.permute.xlu0 %1547
    %1553 = vrot.lane.b32.xlu0 %v1533, 24
    %v1554 = vpop.permute.xlu0 %1553
    %1555 = vrot.lane.b32.xlu0 %v1534, 24
    %v1556 = vpop.permute.xlu0 %1555
    %v1559 = vsel %vm133, %v1170, %v1538
    %v1560 = vsel %vm133, %v1171, %v1540
    %v1561 = vsel %vm181, %v1559, %v1546
    %v1562 = vsel %vm181, %v1560, %v1548
    %v1563 = vsel %vm643, %v1561, %v1554
    %v1564 = vsel %vm643, %v1562, %v1556
    %v1565 = vpack.c.bf16 %v1564, %v1563
    %1566 = vrot.lane.b32.xlu0 %v1003, 32
    %v1567 = vpop.permute.xlu0 %1566
    %1568 = vrot.lane.b32.xlu0 %v1004, 32
    %v1569 = vpop.permute.xlu0 %1568
    %1573 = vrot.lane.b32.xlu0 %v994, 32
    %v1574 = vpop.permute.xlu0 %1573
    %v1577 = vsel %vm84, %v1565, 0
    %1579 = vmatprep.subr.bf16.mxu0 0
    %1580 = vmatpush1.bf16.msra.mxu0 %v1567
    %1581 = vmatprep.subr.bf16.mxu0 0
    %1582 = vmatpush1.bf16.msra.mxu0 %v1569
    %1583 = vmatprep.subr.bf16.mxu0 0
    %1584 = vmatpush1.bf16.msra.mxu0 0
    %1585 = vmatprep.subr.bf16.mxu0 0
    %1586 = vmatpush1.bf16.msra.mxu0 0
    %1587 = vmatprep.subr.bf16.mxu0 0
    %1588 = vmatpush1.bf16.msra.mxu0 0
    %1589 = vmatprep.subr.bf16.mxu0 0
    %1590 = vmatpush1.bf16.msra.mxu0 0
    %1591 = vmatprep.subr.bf16.mxu0 0
    %1592 = vmatpush1.bf16.msra.mxu0 0
    %1593 = vmatprep.subr.bf16.mxu0 0
    %1594 = vmatpush1.bf16.msra.mxu0 0
    %1595 = vmatprep.subr.bf16.mxu0 0
    %1596 = vmatpush1.bf16.msra.mxu0 0
    %1597 = vmatprep.subr.bf16.mxu0 0
    %1598 = vmatpush1.bf16.msra.mxu0 0
    %1599 = vmatprep.subr.bf16.mxu0 0
    %1600 = vmatpush1.bf16.msra.mxu0 0
    %1601 = vmatprep.subr.bf16.mxu0 0
    %1602 = vmatpush1.bf16.msra.mxu0 0
    %1603 = vmatprep.subr.bf16.mxu0 0
    %1604 = vmatpush1.bf16.msra.mxu0 0
    %1605 = vmatprep.subr.bf16.mxu0 0
    %1606 = vmatpush1.bf16.msra.mxu0 0
    %1607 = vmatprep.subr.bf16.mxu0 0
    %1608 = vmatpush1.bf16.msra.mxu0 0
    %1609 = vmatprep.subr.bf16.mxu0 0
    %1610 = vmatpush1.bf16.msra.mxu0 0
    %1611 = vmatprep.mubr.bf16.mxu0 0
    %1612 = vmatmul.mubr.bf16.gmra.mrb[0].mxu0 %v1577
    %v1613 = vpop.f32.mrb[0].mxu0
    %v1614 = vadd.f32 %v1574, %v1613
    %v1615 = vpop.f32.mrb[0].mxu0
    %v1616 = vpop.f32.mrb[0].mxu0
    %v1617 = vadd.f32 %v1574, %v1616
    %v1618 = vpop.f32.mrb[0].mxu0
    %1619 = vdwg.mxu0
    %v1620 = vld [vmem:[%s1 + $0x15] sm:$0x1]
    %v1621 = vld [vmem:[%s1 + $0x16] sm:$0x1]
    %v1622 = vld [vmem:[%s1 + $0x17] sm:$0x1]
    %v1623 = vld [vmem:[%s1 + $0x18] sm:$0x1]
    %v1624 = vadd.f32 %v981, %v1614
    %v1625 = vadd.f32 %v982, %v1617
    %v1626 = vsel %vm84, %v1624, 0.0
    %1627 = vadd.xlane.f32.xlu0 %v1626
    %v1628 = vpop.xlane.xlu0 %1627
    %v1629 = vsel %vm84, %v1625, 0.0
    %1630 = vadd.xlane.f32.xlu0 %v1629
    %v1631 = vpop.xlane.xlu0 %1630
    %v1632 = vmul.f32 %v1628, %v713
    %v1633 = vmul.f32 %v1631, %v713
    %v1634 = vsub.f32 %v1624, %v1632
    %v1635 = vsub.f32 %v1625, %v1633
    %v1636 = vmul.f32 %v1634, %v1634
    %v1637 = vmul.f32 %v1635, %v1635
    %v1638 = vsel %vm84, %v1636, 0.0
    %1639 = vadd.xlane.f32.xlu0 %v1638
    %v1640 = vpop.xlane.xlu0 %1639
    %v1641 = vsel %vm84, %v1637, 0.0
    %1642 = vadd.xlane.f32.xlu0 %v1641
    %v1643 = vpop.xlane.xlu0 %1642
    %v1644 = vmul.f32 %v1640, %v713
    %v1645 = vmul.f32 %v1643, %v713
    %v1646 = vadd.f32 %v1644, 1e-05
    %v1647 = vadd.f32 %v1645, 1e-05
    %v1648 = vrsqrt.pop %v1646
    %v1649 = vrsqrt.pop %v1647
    %v1650 = vmul.f32 %v1634, %v1648
    %v1651 = vmul.f32 %v1635, %v1649
    %v1652 = vlaneseq
    %v1653 = vshrl.u32 %v1652, 7
    %v1654 = vsub.s32 0, %v1653
    %v1655 = vrot.slane %v1620, %v1654
    %v1656 = vmul.f32 %v1650, %v1655
    %v1657 = vmul.f32 %v1651, %v1655
    %v1658 = vlaneseq
    %v1659 = vshrl.u32 %v1658, 7
    %v1660 = vsub.s32 0, %v1659
    %v1661 = vrot.slane %v1621, %v1660
    %v1662 = vadd.f32 %v1656, %v1661
    %v1663 = vadd.f32 %v1657, %v1661
    %s1664 = scalar_lea.vmem %s3, 20
    %v1665 = vld [vmem:[%s1664] sm:$0xf]
    %v1666 = vld [vmem:[%s1664 + $0x4] sm:$0xf]
    %v1667 = vld [vmem:[%s1664 + $0x8] sm:$0xf]
    %v1668 = vld [vmem:[%s1664 + $0xc] sm:$0xf]
    %v1669 = vld [vmem:[%s1664 + $0x10] sm:$0x1]
    %v1670 = vunpack.c.l.bf16 %v1669
    %s1671 = scalar_lea.vmem %s4, 68
    %v1672 = vld [vmem:[%s1671] sm:$0xf]
    %v1673 = vld [vmem:[%s1671 + $0x4] sm:$0xf]
    %v1674 = vld [vmem:[%s1671 + $0x8] sm:$0xf]
    %v1675 = vld [vmem:[%s1671 + $0xc] sm:$0xf]
    %v1676 = vld [vmem:[%s1671 + $0x10] sm:$0xf]
    %v1677 = vld [vmem:[%s1671 + $0x14] sm:$0xf]
    %v1678 = vld [vmem:[%s1671 + $0x18] sm:$0xf]
    %v1679 = vld [vmem:[%s1671 + $0x1c] sm:$0xf]
    %v1680 = vld [vmem:[%s1671 + $0x20] sm:$0xf]
    %v1681 = vld [vmem:[%s1671 + $0x24] sm:$0xf]
    %v1682 = vld [vmem:[%s1671 + $0x28] sm:$0xf]
    %v1683 = vld [vmem:[%s1671 + $0x2c] sm:$0xf]
    %v1684 = vld [vmem:[%s1671 + $0x30] sm:$0xf]
    %v1685 = vld [vmem:[%s1671 + $0x34] sm:$0xf]
    %v1686 = vld [vmem:[%s1671 + $0x38] sm:$0xf]
    %v1687 = vld [vmem:[%s1671 + $0x3c] sm:$0xf]
    %v1688 = vld [vmem:[%s1671 + $0x40] sm:$0x1]
    %v1689 = vunpack.c.l.bf16 %v1688
    %v1690 = vpack.c.bf16 %v1663, %v1662
    %v1691 = vlaneseq
    %v1692 = vshrl.u32 %v1691, 7
    %v1693 = vsub.s32 0, %v1692
    %v1694 = vrot.slane %v1670, %v1693
    %v1699 = vunpack.c.l.b16 %v1665
    %v1700 = vunpack.c.l.b16 %v1666
    %v1701 = vunpack.c.l.b16 %v1667
    %v1702 = vunpack.c.l.b16 %v1668
    %v1703 = vpack.c.b16 %v1700, %v1699
    %v1704 = vpack.c.b16 %v1702, %v1701
    %v1708 = vsel %vm84, %v1690, 0
    %1710 = vmatprep.subr.bf16.mxu0 0
    %1711 = vmatpush1.bf16.msra.mxu0 %v1703
    %1712 = vmatprep.subr.bf16.mxu0 0
    %1713 = vmatpush1.bf16.msra.mxu0 %v1704
    %1714 = vmatprep.subr.bf16.mxu0 0
    %1715 = vmatpush1.bf16.msra.mxu0 0
    %1716 = vmatprep.subr.bf16.mxu0 0
    %1717 = vmatpush1.bf16.msra.mxu0 0
    %1718 = vmatprep.subr.bf16.mxu0 0
    %1719 = vmatpush1.bf16.msra.mxu0 0
    %1720 = vmatprep.subr.bf16.mxu0 0
    %1721 = vmatpush1.bf16.msra.mxu0 0
    %1722 = vmatprep.subr.bf16.mxu0 0
    %1723 = vmatpush1.bf16.msra.mxu0 0
    %1724 = vmatprep.subr.bf16.mxu0 0
    %1725 = vmatpush1.bf16.msra.mxu0 0
    %1726 = vmatprep.subr.bf16.mxu0 0
    %1727 = vmatpush1.bf16.msra.mxu0 0
    %1728 = vmatprep.subr.bf16.mxu0 0
    %1729 = vmatpush1.bf16.msra.mxu0 0
    %1730 = vmatprep.subr.bf16.mxu0 0
    %1731 = vmatpush1.bf16.msra.mxu0 0
    %1732 = vmatprep.subr.bf16.mxu0 0
    %1733 = vmatpush1.bf16.msra.mxu0 0
    %1734 = vmatprep.subr.bf16.mxu0 0
    %1735 = vmatpush1.bf16.msra.mxu0 0
    %1736 = vmatprep.subr.bf16.mxu0 0
    %1737 = vmatpush1.bf16.msra.mxu0 0
    %1738 = vmatprep.subr.bf16.mxu0 0
    %1739 = vmatpush1.bf16.msra.mxu0 0
    %1740 = vmatprep.subr.bf16.mxu0 0
    %1741 = vmatpush1.bf16.msra.mxu0 0
    %1742 = vmatprep.mubr.bf16.mxu0 0
    %1743 = vmatmul.mubr.bf16.gmra.mrb[0].mxu0 %v1708
    %v1744 = vpop.f32.mrb[0].mxu0
    %v1745 = vadd.f32 %v1694, %v1744
    %v1746 = vpop.f32.mrb[0].mxu0
    %v1747 = vpop.f32.mrb[0].mxu0
    %v1748 = vadd.f32 %v1694, %v1747
    %v1749 = vpop.f32.mrb[0].mxu0
    %1750 = vdwg.mxu0
    %v1751 = vmul.f32 %v1745, 0.5
    %v1752 = vmul.f32 %v1748, 0.5
    %v1753 = vmul.f32 %v1745, 0.044715
    %v1754 = vmul.f32 %v1748, 0.044715
    %v1755 = vmul.f32 %v1753, %v1745
    %v1756 = vmul.f32 %v1754, %v1748
    %v1757 = vmul.f32 %v1755, %v1745
    %v1758 = vmul.f32 %v1756, %v1748
    %v1759 = vadd.f32 %v1745, %v1757
    %v1760 = vadd.f32 %v1748, %v1758
    %v1761 = vmul.f32 %v1759, 0.7978846
    %v1762 = vmul.f32 %v1760, 0.7978846
    %v1763 = vtanh.pop %v1761
    %v1764 = vtanh.pop %v1762
    %v1765 = vadd.f32 %v1763, 1.0
    %v1766 = vadd.f32 %v1764, 1.0
    %v1767 = vmul.f32 %v1751, %v1765
    %v1768 = vmul.f32 %v1752, %v1766
    %v1769 = vpack.c.bf16 %v1768, %v1767
    %v1770 = vlaneseq
    %v1771 = vshrl.u32 %v1770, 7
    %v1772 = vsub.s32 0, %v1771
    %v1773 = vrot.slane %v1689, %v1772
    %v1790 = vunpack.c.l.b16 %v1672
    %v1791 = vunpack.c.l.b16 %v1673
    %v1792 = vunpack.c.l.b16 %v1674
    %v1793 = vunpack.c.l.b16 %v1675
    %v1794 = vunpack.c.l.b16 %v1676
    %v1795 = vunpack.c.l.b16 %v1677
    %v1796 = vunpack.c.l.b16 %v1678
    %v1797 = vunpack.c.l.b16 %v1679
    %v1798 = vunpack.c.l.b16 %v1680
    %v1799 = vunpack.c.l.b16 %v1681
    %v1800 = vunpack.c.l.b16 %v1682
    %v1801 = vunpack.c.l.b16 %v1683
    %v1802 = vunpack.c.l.b16 %v1684
    %v1803 = vunpack.c.l.b16 %v1685
    %v1804 = vunpack.c.l.b16 %v1686
    %v1805 = vunpack.c.l.b16 %v1687
    %v1806 = vpack.c.b16 %v1791, %v1790
    %v1807 = vpack.c.b16 %v1793, %v1792
    %v1808 = vpack.c.b16 %v1795, %v1794
    %v1809 = vpack.c.b16 %v1797, %v1796
    %v1810 = vpack.c.b16 %v1799, %v1798
    %v1811 = vpack.c.b16 %v1801, %v1800
    %v1812 = vpack.c.b16 %v1803, %v1802
    %v1813 = vpack.c.b16 %v1805, %v1804
    %1822 = vmatprep.subr.bf16.mxu0 0
    %1823 = vmatpush1.bf16.msra.mxu0 %v1806
    %1824 = vmatprep.subr.bf16.mxu0 0
    %1825 = vmatpush1.bf16.msra.mxu0 %v1807
    %1826 = vmatprep.subr.bf16.mxu0 0
    %1827 = vmatpush1.bf16.msra.mxu0 %v1808
    %1828 = vmatprep.subr.bf16.mxu0 0
    %1829 = vmatpush1.bf16.msra.mxu0 %v1809
    %1830 = vmatprep.subr.bf16.mxu0 0
    %1831 = vmatpush1.bf16.msra.mxu0 %v1810
    %1832 = vmatprep.subr.bf16.mxu0 0
    %1833 = vmatpush1.bf16.msra.mxu0 %v1811
    %1834 = vmatprep.subr.bf16.mxu0 0
    %1835 = vmatpush1.bf16.msra.mxu0 %v1812
    %1836 = vmatprep.subr.bf16.mxu0 0
    %1837 = vmatpush1.bf16.msra.mxu0 %v1813
    %1838 = vmatprep.subr.bf16.mxu0 0
    %1839 = vmatpush1.bf16.msra.mxu0 0
    %1840 = vmatprep.subr.bf16.mxu0 0
    %1841 = vmatpush1.bf16.msra.mxu0 0
    %1842 = vmatprep.subr.bf16.mxu0 0
    %1843 = vmatpush1.bf16.msra.mxu0 0
    %1844 = vmatprep.subr.bf16.mxu0 0
    %1845 = vmatpush1.bf16.msra.mxu0 0
    %1846 = vmatprep.subr.bf16.mxu0 0
    %1847 = vmatpush1.bf16.msra.mxu0 0
    %1848 = vmatprep.subr.bf16.mxu0 0
    %1849 = vmatpush1.bf16.msra.mxu0 0
    %1850 = vmatprep.subr.bf16.mxu0 0
    %1851 = vmatpush1.bf16.msra.mxu0 0
    %1852 = vmatprep.subr.bf16.mxu0 0
    %1853 = vmatpush1.bf16.msra.mxu0 0
    %1854 = vmatprep.mubr.bf16.mxu0 0
    %1855 = vmatmul.mubr.bf16.gmra.mrb[0].mxu0 %v1769
    %v1856 = vpop.f32.mrb[0].mxu0
    %v1857 = vadd.f32 %v1773, %v1856
    %v1858 = vpop.f32.mrb[0].mxu0
    %v1859 = vpop.f32.mrb[0].mxu0
    %v1860 = vadd.f32 %v1773, %v1859
    %v1861 = vpop.f32.mrb[0].mxu0
    %1862 = vdwg.mxu0
    %v1863 = vadd.f32 %v1662, %v1857
    %v1864 = vadd.f32 %v1663, %v1860
    %v1865 = vsel %vm84, %v1863, 0.0
    %1866 = vadd.xlane.f32.xlu0 %v1865
    %v1867 = vpop.xlane.xlu0 %1866
    %v1868 = vsel %vm84, %v1864, 0.0
    %1869 = vadd.xlane.f32.xlu0 %v1868
    %v1870 = vpop.xlane.xlu0 %1869
    %v1871 = vmul.f32 %v1867, %v713
    %v1872 = vmul.f32 %v1870, %v713
    %v1873 = vsub.f32 %v1863, %v1871
    %v1874 = vsub.f32 %v1864, %v1872
    %v1875 = vmul.f32 %v1873, %v1873
    %v1876 = vmul.f32 %v1874, %v1874
    %v1877 = vsel %vm84, %v1875, 0.0
    %1878 = vadd.xlane.f32.xlu0 %v1877
    %v1879 = vpop.xlane.xlu0 %1878
    %v1880 = vsel %vm84, %v1876, 0.0
    %1881 = vadd.xlane.f32.xlu0 %v1880
    %v1882 = vpop.xlane.xlu0 %1881
    %v1883 = vmul.f32 %v1879, %v713
    %v1884 = vmul.f32 %v1882, %v713
    %v1885 = vadd.f32 %v1883, 1e-05
    %v1886 = vadd.f32 %v1884, 1e-05
    %v1887 = vrsqrt.pop %v1885
    %v1888 = vrsqrt.pop %v1886
    %v1889 = vmul.f32 %v1873, %v1887
    %v1890 = vmul.f32 %v1874, %v1888
    %v1891 = vlaneseq
    %v1892 = vshrl.u32 %v1891, 7
    %v1893 = vsub.s32 0, %v1892
    %v1894 = vrot.slane %v1622, %v1893
    %v1895 = vmul.f32 %v1889, %v1894
    %v1896 = vmul.f32 %v1890, %v1894
    %v1897 = vlaneseq
    %v1898 = vshrl.u32 %v1897, 7
    %v1899 = vsub.s32 0, %v1898
    %v1900 = vrot.slane %v1623, %v1899
    %v1901 = vadd.f32 %v1895, %v1900
    %v1902 = vadd.f32 %v1896, %v1900
    %v1904 = vrot.slane %v1901, 2
    %1905 = vrot.lane.b32.xlu0 %v1904, 32
    %v1906 = vpop.permute.xlu0 %1905
    %v1908 = vrot.slane %v1901, 4
    %1909 = vrot.lane.b32.xlu0 %v1908, 64
    %v1910 = vpop.permute.xlu0 %1909
    %v1912 = vrot.slane %v1901, 6
    %1913 = vrot.lane.b32.xlu0 %v1912, 96
    %v1914 = vpop.permute.xlu0 %1913
    %v1917 = vrot.slane %v1902, 2
    %1918 = vrot.lane.b32.xlu0 %v1917, 32
    %v1919 = vpop.permute.xlu0 %1918
    %v1921 = vrot.slane %v1902, 4
    %1922 = vrot.lane.b32.xlu0 %v1921, 64
    %v1923 = vpop.permute.xlu0 %1922
    %v1925 = vrot.slane %v1902, 6
    %1926 = vrot.lane.b32.xlu0 %v1925, 96
    %v1927 = vpop.permute.xlu0 %1926
    %v1929 = vsel %vm84, %v1901, %v1906
    %vm1930 = vcmask 523264
    %v1931 = vsel %vm1930, %v1929, %v1910
    %vm1932 = vcmask 785408
    %v1933 = vsel %vm1932, %v1931, %v1914
    %v1934 = vsel %vm84, %v1902, %v1919
    %v1935 = vsel %vm1930, %v1934, %v1923
    %v1936 = vsel %vm1932, %v1935, %v1927
    %v1937 = vpack.c.bf16 %v1933, %v1933
    %v1938 = vpack.c.bf16 %v1936, %v1936
    %v1939 = vld [vmem:[%s5] sm:$0xf]
    %v1940 = vld [vmem:[%s5 + $0x4] sm:$0xf]
    %v1941 = vld [vmem:[%s5 + $0x8] sm:$0xf]
    %v1942 = vld [vmem:[%s5 + $0xc] sm:$0xf]
    %v1943 = vld [vmem:[%s5 + $0x10] sm:$0xf]
    %v1944 = vld [vmem:[%s5 + $0x14] sm:$0xf]
    %v1945 = vld [vmem:[%s5 + $0x18] sm:$0xf]
    %v1946 = vld [vmem:[%s5 + $0x1c] sm:$0xf]
    %v1947 = vld [vmem:[%s5 + $0x20] sm:$0xf]
    %v1948 = vld [vmem:[%s5 + $0x24] sm:$0xf]
    %v1949 = vld [vmem:[%s5 + $0x28] sm:$0xf]
    %v1950 = vld [vmem:[%s5 + $0x2c] sm:$0xf]
    %v1951 = vld [vmem:[%s5 + $0x30] sm:$0xf]
    %v1952 = vld [vmem:[%s5 + $0x34] sm:$0xf]
    %v1953 = vld [vmem:[%s5 + $0x38] sm:$0xf]
    %v1954 = vld [vmem:[%s5 + $0x3c] sm:$0xf]
    %v1955 = vld [vmem:[%s5 + $0x40] sm:$0xf]
    %v1956 = vld [vmem:[%s5 + $0x44] sm:$0xf]
    %v1957 = vld [vmem:[%s5 + $0x48] sm:$0xf]
    %v1958 = vld [vmem:[%s5 + $0x4c] sm:$0xf]
    %v1959 = vld [vmem:[%s5 + $0x50] sm:$0xf]
    %v1960 = vld [vmem:[%s5 + $0x54] sm:$0xf]
    %v1961 = vld [vmem:[%s5 + $0x58] sm:$0xf]
    %v1962 = vld [vmem:[%s5 + $0x5c] sm:$0xf]
    %v1963 = vld [vmem:[%s5 + $0x60] sm:$0xf]
    %v1964 = vld [vmem:[%s5 + $0x64] sm:$0xf]
    %v1965 = vld [vmem:[%s5 + $0x68] sm:$0xf]
    %v1966 = vld [vmem:[%s5 + $0x6c] sm:$0xf]
    %v1967 = vld [vmem:[%s5 + $0x70] sm:$0xf]
    %v1968 = vld [vmem:[%s5 + $0x74] sm:$0xf]
    %v1969 = vld [vmem:[%s5 + $0x78] sm:$0xf]
    %v1970 = vld [vmem:[%s5 + $0x7c] sm:$0xf]
    %v1971 = vld [vmem:[%s5 + $0x80] sm:$0x1]
    %v1972 = vunpack.c.l.bf16 %v1971
    %v1973 = vlaneseq
    %v1974 = vshrl.u32 %v1973, 7
    %v1975 = vsub.s32 0, %v1974
    %v1976 = vrot.slane %v1972, %v1975
    %v2009 = vunpack.c.l.b16 %v1939
    %v2010 = vunpack.c.l.b16 %v1940
    %v2011 = vunpack.c.l.b16 %v1941
    %v2012 = vunpack.c.l.b16 %v1942
    %v2013 = vunpack.c.l.b16 %v1943
    %v2014 = vunpack.c.l.b16 %v1944
    %v2015 = vunpack.c.l.b16 %v1945
    %v2016 = vunpack.c.l.b16 %v1946
    %v2017 = vunpack.c.l.b16 %v1947
    %v2018 = vunpack.c.l.b16 %v1948
    %v2019 = vunpack.c.l.b16 %v1949
    %v2020 = vunpack.c.l.b16 %v1950
    %v2021 = vunpack.c.l.b16 %v1951
    %v2022 = vunpack.c.l.b16 %v1952
    %v2023 = vunpack.c.l.b16 %v1953
    %v2024 = vunpack.c.l.b16 %v1954
    %v2025 = vunpack.c.l.b16 %v1955
    %v2026 = vunpack.c.l.b16 %v1956
    %v2027 = vunpack.c.l.b16 %v1957
    %v2028 = vunpack.c.l.b16 %v1958
    %v2029 = vunpack.c.l.b16 %v1959
    %v2030 = vunpack.c.l.b16 %v1960
    %v2031 = vunpack.c.l.b16 %v1961
    %v2032 = vunpack.c.l.b16 %v1962
    %v2033 = vunpack.c.l.b16 %v1963
    %v2034 = vunpack.c.l.b16 %v1964
    %v2035 = vunpack.c.l.b16 %v1965
    %v2036 = vunpack.c.l.b16 %v1966
    %v2037 = vunpack.c.l.b16 %v1967
    %v2038 = vunpack.c.l.b16 %v1968
    %v2039 = vunpack.c.l.b16 %v1969
    %v2040 = vunpack.c.l.b16 %v1970
    %v2041 = vpack.c.b16 %v2010, %v2009
    %v2042 = vpack.c.b16 %v2012, %v2011
    %v2043 = vpack.c.b16 %v2014, %v2013
    %v2044 = vpack.c.b16 %v2016, %v2015
    %v2045 = vpack.c.b16 %v2018, %v2017
    %v2046 = vpack.c.b16 %v2020, %v2019
    %v2047 = vpack.c.b16 %v2022, %v2021
    %v2048 = vpack.c.b16 %v2024, %v2023
    %v2049 = vpack.c.b16 %v2026, %v2025
    %v2050 = vpack.c.b16 %v2028, %v2027
    %v2051 = vpack.c.b16 %v2030, %v2029
    %v2052 = vpack.c.b16 %v2032, %v2031
    %v2053 = vpack.c.b16 %v2034, %v2033
    %v2054 = vpack.c.b16 %v2036, %v2035
    %v2055 = vpack.c.b16 %v2038, %v2037
    %v2056 = vpack.c.b16 %v2040, %v2039
    %2073 = vmatprep.subr.bf16.mxu0 0
    %2074 = vmatpush1.bf16.msra.mxu0 %v2041
    %2075 = vmatprep.subr.bf16.mxu0 0
    %2076 = vmatpush1.bf16.msra.mxu0 %v2042
    %2077 = vmatprep.subr.bf16.mxu0 0
    %2078 = vmatpush1.bf16.msra.mxu0 %v2043
    %2079 = vmatprep.subr.bf16.mxu0 0
    %2080 = vmatpush1.bf16.msra.mxu0 %v2044
    %2081 = vmatprep.subr.bf16.mxu0 0
    %2082 = vmatpush1.bf16.msra.mxu0 %v2045
    %2083 = vmatprep.subr.bf16.mxu0 0
    %2084 = vmatpush1.bf16.msra.mxu0 %v2046
    %2085 = vmatprep.subr.bf16.mxu0 0
    %2086 = vmatpush1.bf16.msra.mxu0 %v2047
    %2087 = vmatprep.subr.bf16.mxu0 0
    %2088 = vmatpush1.bf16.msra.mxu0 %v2048
    %2089 = vmatprep.subr.bf16.mxu0 0
    %2090 = vmatpush1.bf16.msra.mxu0 %v2049
    %2091 = vmatprep.subr.bf16.mxu0 0
    %2092 = vmatpush1.bf16.msra.mxu0 %v2050
    %2093 = vmatprep.subr.bf16.mxu0 0
    %2094 = vmatpush1.bf16.msra.mxu0 %v2051
    %2095 = vmatprep.subr.bf16.mxu0 0
    %2096 = vmatpush1.bf16.msra.mxu0 %v2052
    %2097 = vmatprep.subr.bf16.mxu0 0
    %2098 = vmatpush1.bf16.msra.mxu0 %v2053
    %2099 = vmatprep.subr.bf16.mxu0 0
    %2100 = vmatpush1.bf16.msra.mxu0 %v2054
    %2101 = vmatprep.subr.bf16.mxu0 0
    %2102 = vmatpush1.bf16.msra.mxu0 %v2055
    %2103 = vmatprep.subr.bf16.mxu0 0
    %2104 = vmatpush1.bf16.msra.mxu0 %v2056
    %2105 = vmatprep.mubr.bf16.mxu0 %v1938
    %2106 = vmatmul.mubr.bf16.gmra.mrb[0].mxu0 %v1937
    %v2107 = vpop.f32.mrb[0].mxu0
    %v2108 = vadd.f32 %v1976, %v2107
    %v2109 = vpop.f32.mrb[0].mxu0
    %v2110 = vpop.f32.mrb[0].mxu0
    %v2111 = vpop.f32.mrb[0].mxu0
    %2112 = vdwg.mxu0
    %vm2113 = vcmask 58368
    %2114 = vst.msk [vmem:[#allocation2] sm:$0x3] %vm2113, %v2108
    // Predicated region
    $region26: #{tsb_forward.1} parent=1 // pred_check
      _
    $region27: #{tsb_forward.1} parent=1 // pred_check_branch
      %2116 = sbr.rel (0) target = $region29
    $region28: #{tsb_forward.1} parent=1 // pred_region
      %s2118 = ssub.s32 32, 32
      %2119 = vsyncadd [#allocation3], %s2118
      %s2121 = sshll.u32 [#allocation2], 4
      %s2122 = int_to_ptr.vmem [resolvable:$true] %s2121
      %2124 = dma.vmem_to_hbm [thread:$0]  %s2122, 32, %s6, [#allocation3]
    $region29: #{tsb_forward.1} parent=1 // pred_fallthru
      _
    // Predicated region
    $region30: #{tsb_forward.1} parent=1 // pred_check
      _
    $region31: #{tsb_forward.1} parent=1 // pred_check_branch
      %2126 = sbr.rel (0) target = $region33
    $region32: #{tsb_forward.1} parent=1 // pred_region
      %2127 = dma.done [#allocation3], 32
    $region33: #{tsb_forward.1} parent=1 // pred_fallthru
      _
    %2128 = vsyncpa [#allocation3], 1

</llo_original>
